<compile_context>
chip_gen: v5e
topology: v5e:2x2
jax: 0.10.0
libtpu: 0.0.40
codegen_flags: <defaults>
</compile_context>

<pallas_src>
import functools

import jax
import jax.numpy as jnp
from jax.experimental import pallas as pl
from jax.experimental.pallas import tpu as pltpu

# Small synthetic config (BERT-base would be V=30522, H=768, P=512).
B, S = 2, 8          # batch, sequence length
V = 64               # vocab size
P = 16               # max position embeddings
H = 128              # hidden size
EPS = 1e-12


def bert_emb_kernel(ids_ref,                      # SMEM, scalar-prefetched [B*S] int32
                    word_hbm,                     # HBM ref [V, H] (pl.ANY)
                    pos_ref,                      # [TS, H] position(+type) tile
                    gamma_ref, beta_ref,          # [1, H] LayerNorm params
                    out_ref,                      # [TS, H] tile of [S, B*H]
                    wbuf, sems,                   # (2,TS,H) VMEM + (2,TS) DMA sems
                    *, seq_len, ts):
    """Double-buffered word-row gather + pos add + LayerNorm for TS tokens."""
    st = pl.program_id(0)            # sequence-tile index (outer, parallel)
    bi = pl.program_id(1)            # batch index (inner, arbitrary)
    nb = pl.num_programs(1)
    slot = bi & 1

    def issue(batch_idx, slot_idx):
        # Gather TS word-embedding rows for (st, batch_idx) straight from HBM.
        base = batch_idx * seq_len + st * ts
        for t in range(ts):                       # statically unrolled
            row = ids_ref[base + t]
            pltpu.make_async_copy(word_hbm.at[pl.ds(row, 1)],
                                  wbuf.at[slot_idx, pl.ds(t, 1)],
                                  sems.at[slot_idx, t]).start()

    # Prime the pipeline at the start of each inner (batch) loop.
    @pl.when(bi == 0)
    def _():
        issue(bi, slot)

    # Prefetch the next batch's rows into the other slot while we compute.
    @pl.when(bi + 1 < nb)
    def _():
        issue(bi + 1, 1 - slot)

    # Wait for the current slot's rows (re-built descriptors: same sem/bytes).
    for t in range(ts):
        pltpu.make_async_copy(word_hbm.at[pl.ds(0, 1)],
                              wbuf.at[slot, pl.ds(t, 1)],
                              sems.at[slot, t]).wait()

    # word + (position + token_type[0]) -- type row already folded into pos.
    x = wbuf[slot].astype(jnp.float32) + pos_ref[...].astype(jnp.float32)

    # LayerNorm over the hidden dim (eps = 1e-12), stats in f32.
    mean = jnp.mean(x, axis=-1, keepdims=True)
    xc = x - mean
    var = jnp.mean(xc * xc, axis=-1, keepdims=True)
    inv = jax.lax.rsqrt(var + EPS)
    y = (xc * inv * gamma_ref[...].astype(jnp.float32)
         + beta_ref[...].astype(jnp.float32))
    out_ref[...] = y.astype(out_ref.dtype)


def bert_nc_forward(input_ids, attention_mask, word_emb, pos_emb, type_emb,
                    gamma, beta):
    b, s = input_ids.shape
    v, h = word_emb.shape
    ts = min(s, 128)
    assert s % ts == 0 and s <= pos_emb.shape[0]

    # ids -> SMEM; clamp so a bad id can never cause an OOB HBM row DMA.
    ids_flat = jnp.clip(input_ids.reshape(b * s), 0, v - 1).astype(jnp.int32)

    # token_type_ids are all-zero for this module: fold type row 0 into the
    # position table once in the wrapper (tiny XLA op).
    pos_plus_type = (pos_emb[:s].astype(jnp.float32)
                     + type_emb[0].astype(jnp.float32)[None, :]).astype(pos_emb.dtype)
    gamma2d = gamma.reshape(1, h)
    beta2d = beta.reshape(1, h)

    kern = functools.partial(bert_emb_kernel, seq_len=s, ts=ts)
    out_flat = pl.pallas_call(
        kern,
        out_shape=jax.ShapeDtypeStruct((s, b * h), jnp.float32),
        grid_spec=pltpu.PrefetchScalarGridSpec(
            num_scalar_prefetch=1,                    # ids -> SMEM
            grid=(s // ts, b),                        # seq tiles outer, batch inner
            in_specs=[
                pl.BlockSpec(memory_space=pl.ANY),                    # word table in HBM
                pl.BlockSpec((ts, h), lambda st, bi, ids: (st, 0)),   # pos(+type) tile
                pl.BlockSpec((1, h), lambda st, bi, ids: (0, 0)),     # LayerNorm gamma
                pl.BlockSpec((1, h), lambda st, bi, ids: (0, 0)),     # LayerNorm beta
            ],
            # Write the permuted layout directly: token (bi, s) -> out[s, bi*H:(bi+1)*H].
            out_specs=pl.BlockSpec((ts, h), lambda st, bi, ids: (st, bi)),
            scratch_shapes=[
                pltpu.VMEM((2, ts, h), word_emb.dtype),  # double-buffered word rows
                pltpu.SemaphoreType.DMA((2, ts)),        # one DMA sem per (slot, row)
            ],
        ),
        compiler_params=pltpu.CompilerParams(
            dimension_semantics=("parallel", "arbitrary")),
    )(ids_flat, word_emb, pos_plus_type, gamma2d, beta2d)

    # [S, B*H] -> [S, B, H]: row-major metadata reshape, no extra HBM round trip.
    hidden = out_flat.reshape(s, b, h)

    # Inverted attention mask: tiny elementwise op, kept in XLA (a dedicated
    # pallas_call launch would cost more than the op itself).
    inv_mask = 1.0 - attention_mask.astype(jnp.float32)
    return hidden, inv_mask


def ref_forward(input_ids, attention_mask, word_emb, pos_emb, type_emb, gamma, beta):
    b, s = input_ids.shape
    x = (word_emb[input_ids]
         + pos_emb[jnp.arange(s)][None, :, :]
         + type_emb[0][None, None, :])
    mean = x.mean(-1, keepdims=True)
    var = ((x - mean) ** 2).mean(-1, keepdims=True)
    y = (x - mean) / jnp.sqrt(var + EPS) * gamma + beta
    return jnp.transpose(y, (1, 0, 2)), 1.0 - attention_mask.astype(jnp.float32)


if __name__ == "__main__":
    key = jax.random.PRNGKey(0)
    k_ids, k_w, k_p, k_t, k_g, k_b = jax.random.split(key, 6)

    input_ids = jax.random.randint(k_ids, (B, S), 0, V, dtype=jnp.int32)
    attention_mask = jnp.concatenate(
        [jnp.ones((B, S - 2), jnp.int32), jnp.zeros((B, 2), jnp.int32)], axis=1)

    word_emb = jax.random.normal(k_w, (V, H), jnp.float32) * 0.02
    pos_emb = jax.random.normal(k_p, (P, H), jnp.float32) * 0.02
    type_emb = jax.random.normal(k_t, (2, H), jnp.float32) * 0.02
    gamma = 1.0 + 0.1 * jax.random.normal(k_g, (H,), jnp.float32)
    beta = 0.1 * jax.random.normal(k_b, (H,), jnp.float32)

    hidden, inv_mask = jax.block_until_ready(
        bert_nc_forward(input_ids, attention_mask, word_emb, pos_emb, type_emb,
                        gamma, beta))

    ref_hidden, ref_mask = ref_forward(input_ids, attention_mask, word_emb,
                                       pos_emb, type_emb, gamma, beta)

    assert hidden.shape == (S, B, H) and hidden.dtype == jnp.float32
    assert inv_mask.shape == (B, S) and inv_mask.dtype == jnp.float32
    assert jnp.allclose(hidden, ref_hidden, atol=1e-5, rtol=1e-5)
    assert jnp.allclose(inv_mask, ref_mask)

    print("KERNEL_OK")
</pallas_src>

<mosaic_0001>
module attributes {stable_mosaic.version = 11 : i64} {
  func.func @bert_emb_kernel(%arg0: i32, %arg1: i32, %arg2: memref<16xi32, #tpu.memory_space<smem>>, %arg3: memref<64x128xf32, #tpu.memory_space<any>>, %arg4: memref<8x128xf32, #tpu.memory_space<vmem>>, %arg5: memref<1x128xf32, #tpu.memory_space<vmem>>, %arg6: memref<1x128xf32, #tpu.memory_space<vmem>>, %arg7: memref<8x128xf32, #tpu.memory_space<vmem>>, %arg8: memref<2x8x128xf32, #tpu.memory_space<vmem>>, %arg9: memref<2x8x!tpu.dma_semaphore, #tpu.memory_space<semaphore_mem>>) attributes {dimension_semantics = [#tpu.dimension_semantics<parallel>, #tpu.dimension_semantics<arbitrary>], iteration_bounds = array<i64: 1, 2>, scalar_prefetch = 1 : i64, scratch_operands = 2 : i64, tpu.core_type = #tpu.core_type<tc>, window_params = [{}, {transform_indices = @transform_1, window_bounds = array<i64: 8, 128>}, {pipeline_mode = #tpu.pipeline_mode<synchronous>, transform_indices = @transform_2, window_bounds = array<i64: 1, 128>}, {pipeline_mode = #tpu.pipeline_mode<synchronous>, transform_indices = @transform_3, window_bounds = array<i64: 1, 128>}, {transform_indices = @transform_4, window_bounds = array<i64: 8, 128>}]} {
    %c1_i32 = arith.constant 1 : i32
    %0 = arith.andi %arg1, %c1_i32 : i32
    %c0_i32 = arith.constant 0 : i32
    %1 = arith.cmpi eq, %arg1, %c0_i32 : i32
    %2 = arith.extui %1 : i1 to i32
    %c0_i32_0 = arith.constant 0 : i32
    %3 = arith.cmpi ne, %2, %c0_i32_0 : i32
    scf.if %3 {
      %c8_i32 = arith.constant 8 : i32
      %76 = arith.muli %arg1, %c8_i32 : i32
      %c8_i32_51 = arith.constant 8 : i32
      %77 = arith.muli %arg0, %c8_i32_51 : i32
      %78 = arith.addi %76, %77 : i32
      %c0_i32_52 = arith.constant 0 : i32
      %79 = arith.addi %78, %c0_i32_52 : i32
      %80 = arith.index_cast %79 : i32 to index
      %81 = memref.load %arg2[%80] : memref<16xi32, #tpu.memory_space<smem>>
      %c0_i32_53 = arith.constant 0 : i32
      %c0_i32_54 = arith.constant 0 : i32
      %82 = tpu.memref_slice %arg3[%81, %c0_i32_54] : memref<64x128xf32, #tpu.memory_space<any>> -> memref<1x128xf32, #tpu.memory_space<any>>
      %c0_i32_55 = arith.constant 0 : i32
      %c0_i32_56 = arith.constant 0 : i32
      %83 = tpu.memref_slice %arg8[%0, %c0_i32_55, %c0_i32_56] : memref<2x8x128xf32, #tpu.memory_space<vmem>> -> memref<1x1x128xf32, #tpu.memory_space<vmem>>
      %84 = tpu.memref_squeeze %83 : memref<1x1x128xf32, #tpu.memory_space<vmem>> -> memref<1x128xf32, #tpu.memory_space<vmem>>
      %85 = tpu.memref_slice %arg9[%0, %c0_i32_53] : memref<2x8x!tpu.dma_semaphore, #tpu.memory_space<semaphore_mem>> -> memref<1x1x!tpu.dma_semaphore, #tpu.memory_space<semaphore_mem>>
      %86 = tpu.memref_squeeze %85 : memref<1x1x!tpu.dma_semaphore, #tpu.memory_space<semaphore_mem>> -> memref<!tpu.dma_semaphore, #tpu.memory_space<semaphore_mem>>
      tpu.enqueue_dma source(%82 : memref<1x128xf32, #tpu.memory_space<any>>) target(%84 : memref<1x128xf32, #tpu.memory_space<vmem>>) target_semaphore(%86 : memref<!tpu.dma_semaphore, #tpu.memory_space<semaphore_mem>>)
      %c1_i32_57 = arith.constant 1 : i32
      %87 = arith.addi %78, %c1_i32_57 : i32
      %88 = arith.index_cast %87 : i32 to index
      %89 = memref.load %arg2[%88] : memref<16xi32, #tpu.memory_space<smem>>
      %c1_i32_58 = arith.constant 1 : i32
      %c0_i32_59 = arith.constant 0 : i32
      %90 = tpu.memref_slice %arg3[%89, %c0_i32_59] : memref<64x128xf32, #tpu.memory_space<any>> -> memref<1x128xf32, #tpu.memory_space<any>>
      %c1_i32_60 = arith.constant 1 : i32
      %c0_i32_61 = arith.constant 0 : i32
      %91 = tpu.memref_slice %arg8[%0, %c1_i32_60, %c0_i32_61] : memref<2x8x128xf32, #tpu.memory_space<vmem>> -> memref<1x1x128xf32, #tpu.memory_space<vmem>>
      %92 = tpu.memref_squeeze %91 : memref<1x1x128xf32, #tpu.memory_space<vmem>> -> memref<1x128xf32, #tpu.memory_space<vmem>>
      %93 = tpu.memref_slice %arg9[%0, %c1_i32_58] : memref<2x8x!tpu.dma_semaphore, #tpu.memory_space<semaphore_mem>> -> memref<1x1x!tpu.dma_semaphore, #tpu.memory_space<semaphore_mem>>
      %94 = tpu.memref_squeeze %93 : memref<1x1x!tpu.dma_semaphore, #tpu.memory_space<semaphore_mem>> -> memref<!tpu.dma_semaphore, #tpu.memory_space<semaphore_mem>>
      tpu.enqueue_dma source(%90 : memref<1x128xf32, #tpu.memory_space<any>>) target(%92 : memref<1x128xf32, #tpu.memory_space<vmem>>) target_semaphore(%94 : memref<!tpu.dma_semaphore, #tpu.memory_space<semaphore_mem>>)
      %c2_i32_62 = arith.constant 2 : i32
      %95 = arith.addi %78, %c2_i32_62 : i32
      %96 = arith.index_cast %95 : i32 to index
      %97 = memref.load %arg2[%96] : memref<16xi32, #tpu.memory_space<smem>>
      %c2_i32_63 = arith.constant 2 : i32
      %c0_i32_64 = arith.constant 0 : i32
      %98 = tpu.memref_slice %arg3[%97, %c0_i32_64] : memref<64x128xf32, #tpu.memory_space<any>> -> memref<1x128xf32, #tpu.memory_space<any>>
      %c2_i32_65 = arith.constant 2 : i32
      %c0_i32_66 = arith.constant 0 : i32
      %99 = tpu.memref_slice %arg8[%0, %c2_i32_65, %c0_i32_66] : memref<2x8x128xf32, #tpu.memory_space<vmem>> -> memref<1x1x128xf32, #tpu.memory_space<vmem>>
      %100 = tpu.memref_squeeze %99 : memref<1x1x128xf32, #tpu.memory_space<vmem>> -> memref<1x128xf32, #tpu.memory_space<vmem>>
      %101 = tpu.memref_slice %arg9[%0, %c2_i32_63] : memref<2x8x!tpu.dma_semaphore, #tpu.memory_space<semaphore_mem>> -> memref<1x1x!tpu.dma_semaphore, #tpu.memory_space<semaphore_mem>>
      %102 = tpu.memref_squeeze %101 : memref<1x1x!tpu.dma_semaphore, #tpu.memory_space<semaphore_mem>> -> memref<!tpu.dma_semaphore, #tpu.memory_space<semaphore_mem>>
      tpu.enqueue_dma source(%98 : memref<1x128xf32, #tpu.memory_space<any>>) target(%100 : memref<1x128xf32, #tpu.memory_space<vmem>>) target_semaphore(%102 : memref<!tpu.dma_semaphore, #tpu.memory_space<semaphore_mem>>)
      %c3_i32_67 = arith.constant 3 : i32
      %103 = arith.addi %78, %c3_i32_67 : i32
      %104 = arith.index_cast %103 : i32 to index
      %105 = memref.load %arg2[%104] : memref<16xi32, #tpu.memory_space<smem>>
      %c3_i32_68 = arith.constant 3 : i32
      %c0_i32_69 = arith.constant 0 : i32
      %106 = tpu.memref_slice %arg3[%105, %c0_i32_69] : memref<64x128xf32, #tpu.memory_space<any>> -> memref<1x128xf32, #tpu.memory_space<any>>
      %c3_i32_70 = arith.constant 3 : i32
      %c0_i32_71 = arith.constant 0 : i32
      %107 = tpu.memref_slice %arg8[%0, %c3_i32_70, %c0_i32_71] : memref<2x8x128xf32, #tpu.memory_space<vmem>> -> memref<1x1x128xf32, #tpu.memory_space<vmem>>
      %108 = tpu.memref_squeeze %107 : memref<1x1x128xf32, #tpu.memory_space<vmem>> -> memref<1x128xf32, #tpu.memory_space<vmem>>
      %109 = tpu.memref_slice %arg9[%0, %c3_i32_68] : memref<2x8x!tpu.dma_semaphore, #tpu.memory_space<semaphore_mem>> -> memref<1x1x!tpu.dma_semaphore, #tpu.memory_space<semaphore_mem>>
      %110 = tpu.memref_squeeze %109 : memref<1x1x!tpu.dma_semaphore, #tpu.memory_space<semaphore_mem>> -> memref<!tpu.dma_semaphore, #tpu.memory_space<semaphore_mem>>
      tpu.enqueue_dma source(%106 : memref<1x128xf32, #tpu.memory_space<any>>) target(%108 : memref<1x128xf32, #tpu.memory_space<vmem>>) target_semaphore(%110 : memref<!tpu.dma_semaphore, #tpu.memory_space<semaphore_mem>>)
      %c4_i32_72 = arith.constant 4 : i32
      %111 = arith.addi %78, %c4_i32_72 : i32
      %112 = arith.index_cast %111 : i32 to index
      %113 = memref.load %arg2[%112] : memref<16xi32, #tpu.memory_space<smem>>
      %c4_i32_73 = arith.constant 4 : i32
      %c0_i32_74 = arith.constant 0 : i32
      %114 = tpu.memref_slice %arg3[%113, %c0_i32_74] : memref<64x128xf32, #tpu.memory_space<any>> -> memref<1x128xf32, #tpu.memory_space<any>>
      %c4_i32_75 = arith.constant 4 : i32
      %c0_i32_76 = arith.constant 0 : i32
      %115 = tpu.memref_slice %arg8[%0, %c4_i32_75, %c0_i32_76] : memref<2x8x128xf32, #tpu.memory_space<vmem>> -> memref<1x1x128xf32, #tpu.memory_space<vmem>>
      %116 = tpu.memref_squeeze %115 : memref<1x1x128xf32, #tpu.memory_space<vmem>> -> memref<1x128xf32, #tpu.memory_space<vmem>>
      %117 = tpu.memref_slice %arg9[%0, %c4_i32_73] : memref<2x8x!tpu.dma_semaphore, #tpu.memory_space<semaphore_mem>> -> memref<1x1x!tpu.dma_semaphore, #tpu.memory_space<semaphore_mem>>
      %118 = tpu.memref_squeeze %117 : memref<1x1x!tpu.dma_semaphore, #tpu.memory_space<semaphore_mem>> -> memref<!tpu.dma_semaphore, #tpu.memory_space<semaphore_mem>>
      tpu.enqueue_dma source(%114 : memref<1x128xf32, #tpu.memory_space<any>>) target(%116 : memref<1x128xf32, #tpu.memory_space<vmem>>) target_semaphore(%118 : memref<!tpu.dma_semaphore, #tpu.memory_space<semaphore_mem>>)
      %c5_i32_77 = arith.constant 5 : i32
      %119 = arith.addi %78, %c5_i32_77 : i32
      %120 = arith.index_cast %119 : i32 to index
      %121 = memref.load %arg2[%120] : memref<16xi32, #tpu.memory_space<smem>>
      %c5_i32_78 = arith.constant 5 : i32
      %c0_i32_79 = arith.constant 0 : i32
      %122 = tpu.memref_slice %arg3[%121, %c0_i32_79] : memref<64x128xf32, #tpu.memory_space<any>> -> memref<1x128xf32, #tpu.memory_space<any>>
      %c5_i32_80 = arith.constant 5 : i32
      %c0_i32_81 = arith.constant 0 : i32
      %123 = tpu.memref_slice %arg8[%0, %c5_i32_80, %c0_i32_81] : memref<2x8x128xf32, #tpu.memory_space<vmem>> -> memref<1x1x128xf32, #tpu.memory_space<vmem>>
      %124 = tpu.memref_squeeze %123 : memref<1x1x128xf32, #tpu.memory_space<vmem>> -> memref<1x128xf32, #tpu.memory_space<vmem>>
      %125 = tpu.memref_slice %arg9[%0, %c5_i32_78] : memref<2x8x!tpu.dma_semaphore, #tpu.memory_space<semaphore_mem>> -> memref<1x1x!tpu.dma_semaphore, #tpu.memory_space<semaphore_mem>>
      %126 = tpu.memref_squeeze %125 : memref<1x1x!tpu.dma_semaphore, #tpu.memory_space<semaphore_mem>> -> memref<!tpu.dma_semaphore, #tpu.memory_space<semaphore_mem>>
      tpu.enqueue_dma source(%122 : memref<1x128xf32, #tpu.memory_space<any>>) target(%124 : memref<1x128xf32, #tpu.memory_space<vmem>>) target_semaphore(%126 : memref<!tpu.dma_semaphore, #tpu.memory_space<semaphore_mem>>)
      %c6_i32_82 = arith.constant 6 : i32
      %127 = arith.addi %78, %c6_i32_82 : i32
      %128 = arith.index_cast %127 : i32 to index
      %129 = memref.load %arg2[%128] : memref<16xi32, #tpu.memory_space<smem>>
      %c6_i32_83 = arith.constant 6 : i32
      %c0_i32_84 = arith.constant 0 : i32
      %130 = tpu.memref_slice %arg3[%129, %c0_i32_84] : memref<64x128xf32, #tpu.memory_space<any>> -> memref<1x128xf32, #tpu.memory_space<any>>
      %c6_i32_85 = arith.constant 6 : i32
      %c0_i32_86 = arith.constant 0 : i32
      %131 = tpu.memref_slice %arg8[%0, %c6_i32_85, %c0_i32_86] : memref<2x8x128xf32, #tpu.memory_space<vmem>> -> memref<1x1x128xf32, #tpu.memory_space<vmem>>
      %132 = tpu.memref_squeeze %131 : memref<1x1x128xf32, #tpu.memory_space<vmem>> -> memref<1x128xf32, #tpu.memory_space<vmem>>
      %133 = tpu.memref_slice %arg9[%0, %c6_i32_83] : memref<2x8x!tpu.dma_semaphore, #tpu.memory_space<semaphore_mem>> -> memref<1x1x!tpu.dma_semaphore, #tpu.memory_space<semaphore_mem>>
      %134 = tpu.memref_squeeze %133 : memref<1x1x!tpu.dma_semaphore, #tpu.memory_space<semaphore_mem>> -> memref<!tpu.dma_semaphore, #tpu.memory_space<semaphore_mem>>
      tpu.enqueue_dma source(%130 : memref<1x128xf32, #tpu.memory_space<any>>) target(%132 : memref<1x128xf32, #tpu.memory_space<vmem>>) target_semaphore(%134 : memref<!tpu.dma_semaphore, #tpu.memory_space<semaphore_mem>>)
      %c7_i32_87 = arith.constant 7 : i32
      %135 = arith.addi %78, %c7_i32_87 : i32
      %136 = arith.index_cast %135 : i32 to index
      %137 = memref.load %arg2[%136] : memref<16xi32, #tpu.memory_space<smem>>
      %c7_i32_88 = arith.constant 7 : i32
      %c0_i32_89 = arith.constant 0 : i32
      %138 = tpu.memref_slice %arg3[%137, %c0_i32_89] : memref<64x128xf32, #tpu.memory_space<any>> -> memref<1x128xf32, #tpu.memory_space<any>>
      %c7_i32_90 = arith.constant 7 : i32
      %c0_i32_91 = arith.constant 0 : i32
      %139 = tpu.memref_slice %arg8[%0, %c7_i32_90, %c0_i32_91] : memref<2x8x128xf32, #tpu.memory_space<vmem>> -> memref<1x1x128xf32, #tpu.memory_space<vmem>>
      %140 = tpu.memref_squeeze %139 : memref<1x1x128xf32, #tpu.memory_space<vmem>> -> memref<1x128xf32, #tpu.memory_space<vmem>>
      %141 = tpu.memref_slice %arg9[%0, %c7_i32_88] : memref<2x8x!tpu.dma_semaphore, #tpu.memory_space<semaphore_mem>> -> memref<1x1x!tpu.dma_semaphore, #tpu.memory_space<semaphore_mem>>
      %142 = tpu.memref_squeeze %141 : memref<1x1x!tpu.dma_semaphore, #tpu.memory_space<semaphore_mem>> -> memref<!tpu.dma_semaphore, #tpu.memory_space<semaphore_mem>>
      tpu.enqueue_dma source(%138 : memref<1x128xf32, #tpu.memory_space<any>>) target(%140 : memref<1x128xf32, #tpu.memory_space<vmem>>) target_semaphore(%142 : memref<!tpu.dma_semaphore, #tpu.memory_space<semaphore_mem>>)
    } else {
    }
    %c1_i32_1 = arith.constant 1 : i32
    %4 = arith.addi %arg1, %c1_i32_1 : i32
    %c2_i32 = arith.constant 2 : i32
    %5 = arith.cmpi slt, %4, %c2_i32 : i32
    %6 = arith.extui %5 : i1 to i32
    %c0_i32_2 = arith.constant 0 : i32
    %7 = arith.cmpi ne, %6, %c0_i32_2 : i32
    scf.if %7 {
      %c1_i32_51 = arith.constant 1 : i32
      %76 = arith.addi %arg1, %c1_i32_51 : i32
      %c1_i32_52 = arith.constant 1 : i32
      %77 = arith.subi %c1_i32_52, %0 : i32
      %c8_i32 = arith.constant 8 : i32
      %78 = arith.muli %76, %c8_i32 : i32
      %c8_i32_53 = arith.constant 8 : i32
      %79 = arith.muli %arg0, %c8_i32_53 : i32
      %80 = arith.addi %78, %79 : i32
      %c0_i32_54 = arith.constant 0 : i32
      %81 = arith.addi %80, %c0_i32_54 : i32
      %82 = arith.index_cast %81 : i32 to index
      %83 = memref.load %arg2[%82] : memref<16xi32, #tpu.memory_space<smem>>
      %c0_i32_55 = arith.constant 0 : i32
      %c0_i32_56 = arith.constant 0 : i32
      %84 = tpu.memref_slice %arg3[%83, %c0_i32_56] : memref<64x128xf32, #tpu.memory_space<any>> -> memref<1x128xf32, #tpu.memory_space<any>>
      %c0_i32_57 = arith.constant 0 : i32
      %c0_i32_58 = arith.constant 0 : i32
      %85 = tpu.memref_slice %arg8[%77, %c0_i32_57, %c0_i32_58] : memref<2x8x128xf32, #tpu.memory_space<vmem>> -> memref<1x1x128xf32, #tpu.memory_space<vmem>>
      %86 = tpu.memref_squeeze %85 : memref<1x1x128xf32, #tpu.memory_space<vmem>> -> memref<1x128xf32, #tpu.memory_space<vmem>>
      %87 = tpu.memref_slice %arg9[%77, %c0_i32_55] : memref<2x8x!tpu.dma_semaphore, #tpu.memory_space<semaphore_mem>> -> memref<1x1x!tpu.dma_semaphore, #tpu.memory_space<semaphore_mem>>
      %88 = tpu.memref_squeeze %87 : memref<1x1x!tpu.dma_semaphore, #tpu.memory_space<semaphore_mem>> -> memref<!tpu.dma_semaphore, #tpu.memory_space<semaphore_mem>>
      tpu.enqueue_dma source(%84 : memref<1x128xf32, #tpu.memory_space<any>>) target(%86 : memref<1x128xf32, #tpu.memory_space<vmem>>) target_semaphore(%88 : memref<!tpu.dma_semaphore, #tpu.memory_space<semaphore_mem>>)
      %c1_i32_59 = arith.constant 1 : i32
      %89 = arith.addi %80, %c1_i32_59 : i32
      %90 = arith.index_cast %89 : i32 to index
      %91 = memref.load %arg2[%90] : memref<16xi32, #tpu.memory_space<smem>>
      %c1_i32_60 = arith.constant 1 : i32
      %c0_i32_61 = arith.constant 0 : i32
      %92 = tpu.memref_slice %arg3[%91, %c0_i32_61] : memref<64x128xf32, #tpu.memory_space<any>> -> memref<1x128xf32, #tpu.memory_space<any>>
      %c1_i32_62 = arith.constant 1 : i32
      %c0_i32_63 = arith.constant 0 : i32
      %93 = tpu.memref_slice %arg8[%77, %c1_i32_62, %c0_i32_63] : memref<2x8x128xf32, #tpu.memory_space<vmem>> -> memref<1x1x128xf32, #tpu.memory_space<vmem>>
      %94 = tpu.memref_squeeze %93 : memref<1x1x128xf32, #tpu.memory_space<vmem>> -> memref<1x128xf32, #tpu.memory_space<vmem>>
      %95 = tpu.memref_slice %arg9[%77, %c1_i32_60] : memref<2x8x!tpu.dma_semaphore, #tpu.memory_space<semaphore_mem>> -> memref<1x1x!tpu.dma_semaphore, #tpu.memory_space<semaphore_mem>>
      %96 = tpu.memref_squeeze %95 : memref<1x1x!tpu.dma_semaphore, #tpu.memory_space<semaphore_mem>> -> memref<!tpu.dma_semaphore, #tpu.memory_space<semaphore_mem>>
      tpu.enqueue_dma source(%92 : memref<1x128xf32, #tpu.memory_space<any>>) target(%94 : memref<1x128xf32, #tpu.memory_space<vmem>>) target_semaphore(%96 : memref<!tpu.dma_semaphore, #tpu.memory_space<semaphore_mem>>)
      %c2_i32_64 = arith.constant 2 : i32
      %97 = arith.addi %80, %c2_i32_64 : i32
      %98 = arith.index_cast %97 : i32 to index
      %99 = memref.load %arg2[%98] : memref<16xi32, #tpu.memory_space<smem>>
      %c2_i32_65 = arith.constant 2 : i32
      %c0_i32_66 = arith.constant 0 : i32
      %100 = tpu.memref_slice %arg3[%99, %c0_i32_66] : memref<64x128xf32, #tpu.memory_space<any>> -> memref<1x128xf32, #tpu.memory_space<any>>
      %c2_i32_67 = arith.constant 2 : i32
      %c0_i32_68 = arith.constant 0 : i32
      %101 = tpu.memref_slice %arg8[%77, %c2_i32_67, %c0_i32_68] : memref<2x8x128xf32, #tpu.memory_space<vmem>> -> memref<1x1x128xf32, #tpu.memory_space<vmem>>
      %102 = tpu.memref_squeeze %101 : memref<1x1x128xf32, #tpu.memory_space<vmem>> -> memref<1x128xf32, #tpu.memory_space<vmem>>
      %103 = tpu.memref_slice %arg9[%77, %c2_i32_65] : memref<2x8x!tpu.dma_semaphore, #tpu.memory_space<semaphore_mem>> -> memref<1x1x!tpu.dma_semaphore, #tpu.memory_space<semaphore_mem>>
      %104 = tpu.memref_squeeze %103 : memref<1x1x!tpu.dma_semaphore, #tpu.memory_space<semaphore_mem>> -> memref<!tpu.dma_semaphore, #tpu.memory_space<semaphore_mem>>
      tpu.enqueue_dma source(%100 : memref<1x128xf32, #tpu.memory_space<any>>) target(%102 : memref<1x128xf32, #tpu.memory_space<vmem>>) target_semaphore(%104 : memref<!tpu.dma_semaphore, #tpu.memory_space<semaphore_mem>>)
      %c3_i32_69 = arith.constant 3 : i32
      %105 = arith.addi %80, %c3_i32_69 : i32
      %106 = arith.index_cast %105 : i32 to index
      %107 = memref.load %arg2[%106] : memref<16xi32, #tpu.memory_space<smem>>
      %c3_i32_70 = arith.constant 3 : i32
      %c0_i32_71 = arith.constant 0 : i32
      %108 = tpu.memref_slice %arg3[%107, %c0_i32_71] : memref<64x128xf32, #tpu.memory_space<any>> -> memref<1x128xf32, #tpu.memory_space<any>>
      %c3_i32_72 = arith.constant 3 : i32
      %c0_i32_73 = arith.constant 0 : i32
      %109 = tpu.memref_slice %arg8[%77, %c3_i32_72, %c0_i32_73] : memref<2x8x128xf32, #tpu.memory_space<vmem>> -> memref<1x1x128xf32, #tpu.memory_space<vmem>>
      %110 = tpu.memref_squeeze %109 : memref<1x1x128xf32, #tpu.memory_space<vmem>> -> memref<1x128xf32, #tpu.memory_space<vmem>>
      %111 = tpu.memref_slice %arg9[%77, %c3_i32_70] : memref<2x8x!tpu.dma_semaphore, #tpu.memory_space<semaphore_mem>> -> memref<1x1x!tpu.dma_semaphore, #tpu.memory_space<semaphore_mem>>
      %112 = tpu.memref_squeeze %111 : memref<1x1x!tpu.dma_semaphore, #tpu.memory_space<semaphore_mem>> -> memref<!tpu.dma_semaphore, #tpu.memory_space<semaphore_mem>>
      tpu.enqueue_dma source(%108 : memref<1x128xf32, #tpu.memory_space<any>>) target(%110 : memref<1x128xf32, #tpu.memory_space<vmem>>) target_semaphore(%112 : memref<!tpu.dma_semaphore, #tpu.memory_space<semaphore_mem>>)
      %c4_i32_74 = arith.constant 4 : i32
      %113 = arith.addi %80, %c4_i32_74 : i32
      %114 = arith.index_cast %113 : i32 to index
      %115 = memref.load %arg2[%114] : memref<16xi32, #tpu.memory_space<smem>>
      %c4_i32_75 = arith.constant 4 : i32
      %c0_i32_76 = arith.constant 0 : i32
      %116 = tpu.memref_slice %arg3[%115, %c0_i32_76] : memref<64x128xf32, #tpu.memory_space<any>> -> memref<1x128xf32, #tpu.memory_space<any>>
      %c4_i32_77 = arith.constant 4 : i32
      %c0_i32_78 = arith.constant 0 : i32
      %117 = tpu.memref_slice %arg8[%77, %c4_i32_77, %c0_i32_78] : memref<2x8x128xf32, #tpu.memory_space<vmem>> -> memref<1x1x128xf32, #tpu.memory_space<vmem>>
      %118 = tpu.memref_squeeze %117 : memref<1x1x128xf32, #tpu.memory_space<vmem>> -> memref<1x128xf32, #tpu.memory_space<vmem>>
      %119 = tpu.memref_slice %arg9[%77, %c4_i32_75] : memref<2x8x!tpu.dma_semaphore, #tpu.memory_space<semaphore_mem>> -> memref<1x1x!tpu.dma_semaphore, #tpu.memory_space<semaphore_mem>>
      %120 = tpu.memref_squeeze %119 : memref<1x1x!tpu.dma_semaphore, #tpu.memory_space<semaphore_mem>> -> memref<!tpu.dma_semaphore, #tpu.memory_space<semaphore_mem>>
      tpu.enqueue_dma source(%116 : memref<1x128xf32, #tpu.memory_space<any>>) target(%118 : memref<1x128xf32, #tpu.memory_space<vmem>>) target_semaphore(%120 : memref<!tpu.dma_semaphore, #tpu.memory_space<semaphore_mem>>)
      %c5_i32_79 = arith.constant 5 : i32
      %121 = arith.addi %80, %c5_i32_79 : i32
      %122 = arith.index_cast %121 : i32 to index
      %123 = memref.load %arg2[%122] : memref<16xi32, #tpu.memory_space<smem>>
      %c5_i32_80 = arith.constant 5 : i32
      %c0_i32_81 = arith.constant 0 : i32
      %124 = tpu.memref_slice %arg3[%123, %c0_i32_81] : memref<64x128xf32, #tpu.memory_space<any>> -> memref<1x128xf32, #tpu.memory_space<any>>
      %c5_i32_82 = arith.constant 5 : i32
      %c0_i32_83 = arith.constant 0 : i32
      %125 = tpu.memref_slice %arg8[%77, %c5_i32_82, %c0_i32_83] : memref<2x8x128xf32, #tpu.memory_space<vmem>> -> memref<1x1x128xf32, #tpu.memory_space<vmem>>
      %126 = tpu.memref_squeeze %125 : memref<1x1x128xf32, #tpu.memory_space<vmem>> -> memref<1x128xf32, #tpu.memory_space<vmem>>
      %127 = tpu.memref_slice %arg9[%77, %c5_i32_80] : memref<2x8x!tpu.dma_semaphore, #tpu.memory_space<semaphore_mem>> -> memref<1x1x!tpu.dma_semaphore, #tpu.memory_space<semaphore_mem>>
      %128 = tpu.memref_squeeze %127 : memref<1x1x!tpu.dma_semaphore, #tpu.memory_space<semaphore_mem>> -> memref<!tpu.dma_semaphore, #tpu.memory_space<semaphore_mem>>
      tpu.enqueue_dma source(%124 : memref<1x128xf32, #tpu.memory_space<any>>) target(%126 : memref<1x128xf32, #tpu.memory_space<vmem>>) target_semaphore(%128 : memref<!tpu.dma_semaphore, #tpu.memory_space<semaphore_mem>>)
      %c6_i32_84 = arith.constant 6 : i32
      %129 = arith.addi %80, %c6_i32_84 : i32
      %130 = arith.index_cast %129 : i32 to index
      %131 = memref.load %arg2[%130] : memref<16xi32, #tpu.memory_space<smem>>
      %c6_i32_85 = arith.constant 6 : i32
      %c0_i32_86 = arith.constant 0 : i32
      %132 = tpu.memref_slice %arg3[%131, %c0_i32_86] : memref<64x128xf32, #tpu.memory_space<any>> -> memref<1x128xf32, #tpu.memory_space<any>>
      %c6_i32_87 = arith.constant 6 : i32
      %c0_i32_88 = arith.constant 0 : i32
      %133 = tpu.memref_slice %arg8[%77, %c6_i32_87, %c0_i32_88] : memref<2x8x128xf32, #tpu.memory_space<vmem>> -> memref<1x1x128xf32, #tpu.memory_space<vmem>>
      %134 = tpu.memref_squeeze %133 : memref<1x1x128xf32, #tpu.memory_space<vmem>> -> memref<1x128xf32, #tpu.memory_space<vmem>>
      %135 = tpu.memref_slice %arg9[%77, %c6_i32_85] : memref<2x8x!tpu.dma_semaphore, #tpu.memory_space<semaphore_mem>> -> memref<1x1x!tpu.dma_semaphore, #tpu.memory_space<semaphore_mem>>
      %136 = tpu.memref_squeeze %135 : memref<1x1x!tpu.dma_semaphore, #tpu.memory_space<semaphore_mem>> -> memref<!tpu.dma_semaphore, #tpu.memory_space<semaphore_mem>>
      tpu.enqueue_dma source(%132 : memref<1x128xf32, #tpu.memory_space<any>>) target(%134 : memref<1x128xf32, #tpu.memory_space<vmem>>) target_semaphore(%136 : memref<!tpu.dma_semaphore, #tpu.memory_space<semaphore_mem>>)
      %c7_i32_89 = arith.constant 7 : i32
      %137 = arith.addi %80, %c7_i32_89 : i32
      %138 = arith.index_cast %137 : i32 to index
      %139 = memref.load %arg2[%138] : memref<16xi32, #tpu.memory_space<smem>>
      %c7_i32_90 = arith.constant 7 : i32
      %c0_i32_91 = arith.constant 0 : i32
      %140 = tpu.memref_slice %arg3[%139, %c0_i32_91] : memref<64x128xf32, #tpu.memory_space<any>> -> memref<1x128xf32, #tpu.memory_space<any>>
      %c7_i32_92 = arith.constant 7 : i32
      %c0_i32_93 = arith.constant 0 : i32
      %141 = tpu.memref_slice %arg8[%77, %c7_i32_92, %c0_i32_93] : memref<2x8x128xf32, #tpu.memory_space<vmem>> -> memref<1x1x128xf32, #tpu.memory_space<vmem>>
      %142 = tpu.memref_squeeze %141 : memref<1x1x128xf32, #tpu.memory_space<vmem>> -> memref<1x128xf32, #tpu.memory_space<vmem>>
      %143 = tpu.memref_slice %arg9[%77, %c7_i32_90] : memref<2x8x!tpu.dma_semaphore, #tpu.memory_space<semaphore_mem>> -> memref<1x1x!tpu.dma_semaphore, #tpu.memory_space<semaphore_mem>>
      %144 = tpu.memref_squeeze %143 : memref<1x1x!tpu.dma_semaphore, #tpu.memory_space<semaphore_mem>> -> memref<!tpu.dma_semaphore, #tpu.memory_space<semaphore_mem>>
      tpu.enqueue_dma source(%140 : memref<1x128xf32, #tpu.memory_space<any>>) target(%142 : memref<1x128xf32, #tpu.memory_space<vmem>>) target_semaphore(%144 : memref<!tpu.dma_semaphore, #tpu.memory_space<semaphore_mem>>)
    } else {
    }
    %c0_i32_3 = arith.constant 0 : i32
    %c0_i32_4 = arith.constant 0 : i32
    %c0_i32_5 = arith.constant 0 : i32
    %8 = tpu.memref_slice %arg3[%c0_i32_4, %c0_i32_5] : memref<64x128xf32, #tpu.memory_space<any>> -> memref<1x128xf32, #tpu.memory_space<any>>
    %c0_i32_6 = arith.constant 0 : i32
    %c0_i32_7 = arith.constant 0 : i32
    %9 = tpu.memref_slice %arg8[%0, %c0_i32_6, %c0_i32_7] : memref<2x8x128xf32, #tpu.memory_space<vmem>> -> memref<1x1x128xf32, #tpu.memory_space<vmem>>
    %10 = tpu.memref_squeeze %9 : memref<1x1x128xf32, #tpu.memory_space<vmem>> -> memref<1x128xf32, #tpu.memory_space<vmem>>
    %11 = tpu.memref_slice %arg9[%0, %c0_i32_3] : memref<2x8x!tpu.dma_semaphore, #tpu.memory_space<semaphore_mem>> -> memref<1x1x!tpu.dma_semaphore, #tpu.memory_space<semaphore_mem>>
    %12 = tpu.memref_squeeze %11 : memref<1x1x!tpu.dma_semaphore, #tpu.memory_space<semaphore_mem>> -> memref<!tpu.dma_semaphore, #tpu.memory_space<semaphore_mem>>
    tpu.wait_dma2 semaphore(%12 : memref<!tpu.dma_semaphore, #tpu.memory_space<semaphore_mem>>) src(%8 : memref<1x128xf32, #tpu.memory_space<any>>) dst(%10 : memref<1x128xf32, #tpu.memory_space<vmem>>)
    %c1_i32_8 = arith.constant 1 : i32
    %c0_i32_9 = arith.constant 0 : i32
    %c0_i32_10 = arith.constant 0 : i32
    %13 = tpu.memref_slice %arg3[%c0_i32_9, %c0_i32_10] : memref<64x128xf32, #tpu.memory_space<any>> -> memref<1x128xf32, #tpu.memory_space<any>>
    %c1_i32_11 = arith.constant 1 : i32
    %c0_i32_12 = arith.constant 0 : i32
    %14 = tpu.memref_slice %arg8[%0, %c1_i32_11, %c0_i32_12] : memref<2x8x128xf32, #tpu.memory_space<vmem>> -> memref<1x1x128xf32, #tpu.memory_space<vmem>>
    %15 = tpu.memref_squeeze %14 : memref<1x1x128xf32, #tpu.memory_space<vmem>> -> memref<1x128xf32, #tpu.memory_space<vmem>>
    %16 = tpu.memref_slice %arg9[%0, %c1_i32_8] : memref<2x8x!tpu.dma_semaphore, #tpu.memory_space<semaphore_mem>> -> memref<1x1x!tpu.dma_semaphore, #tpu.memory_space<semaphore_mem>>
    %17 = tpu.memref_squeeze %16 : memref<1x1x!tpu.dma_semaphore, #tpu.memory_space<semaphore_mem>> -> memref<!tpu.dma_semaphore, #tpu.memory_space<semaphore_mem>>
    tpu.wait_dma2 semaphore(%17 : memref<!tpu.dma_semaphore, #tpu.memory_space<semaphore_mem>>) src(%13 : memref<1x128xf32, #tpu.memory_space<any>>) dst(%15 : memref<1x128xf32, #tpu.memory_space<vmem>>)
    %c2_i32_13 = arith.constant 2 : i32
    %c0_i32_14 = arith.constant 0 : i32
    %c0_i32_15 = arith.constant 0 : i32
    %18 = tpu.memref_slice %arg3[%c0_i32_14, %c0_i32_15] : memref<64x128xf32, #tpu.memory_space<any>> -> memref<1x128xf32, #tpu.memory_space<any>>
    %c2_i32_16 = arith.constant 2 : i32
    %c0_i32_17 = arith.constant 0 : i32
    %19 = tpu.memref_slice %arg8[%0, %c2_i32_16, %c0_i32_17] : memref<2x8x128xf32, #tpu.memory_space<vmem>> -> memref<1x1x128xf32, #tpu.memory_space<vmem>>
    %20 = tpu.memref_squeeze %19 : memref<1x1x128xf32, #tpu.memory_space<vmem>> -> memref<1x128xf32, #tpu.memory_space<vmem>>
    %21 = tpu.memref_slice %arg9[%0, %c2_i32_13] : memref<2x8x!tpu.dma_semaphore, #tpu.memory_space<semaphore_mem>> -> memref<1x1x!tpu.dma_semaphore, #tpu.memory_space<semaphore_mem>>
    %22 = tpu.memref_squeeze %21 : memref<1x1x!tpu.dma_semaphore, #tpu.memory_space<semaphore_mem>> -> memref<!tpu.dma_semaphore, #tpu.memory_space<semaphore_mem>>
    tpu.wait_dma2 semaphore(%22 : memref<!tpu.dma_semaphore, #tpu.memory_space<semaphore_mem>>) src(%18 : memref<1x128xf32, #tpu.memory_space<any>>) dst(%20 : memref<1x128xf32, #tpu.memory_space<vmem>>)
    %c3_i32 = arith.constant 3 : i32
    %c0_i32_18 = arith.constant 0 : i32
    %c0_i32_19 = arith.constant 0 : i32
    %23 = tpu.memref_slice %arg3[%c0_i32_18, %c0_i32_19] : memref<64x128xf32, #tpu.memory_space<any>> -> memref<1x128xf32, #tpu.memory_space<any>>
    %c3_i32_20 = arith.constant 3 : i32
    %c0_i32_21 = arith.constant 0 : i32
    %24 = tpu.memref_slice %arg8[%0, %c3_i32_20, %c0_i32_21] : memref<2x8x128xf32, #tpu.memory_space<vmem>> -> memref<1x1x128xf32, #tpu.memory_space<vmem>>
    %25 = tpu.memref_squeeze %24 : memref<1x1x128xf32, #tpu.memory_space<vmem>> -> memref<1x128xf32, #tpu.memory_space<vmem>>
    %26 = tpu.memref_slice %arg9[%0, %c3_i32] : memref<2x8x!tpu.dma_semaphore, #tpu.memory_space<semaphore_mem>> -> memref<1x1x!tpu.dma_semaphore, #tpu.memory_space<semaphore_mem>>
    %27 = tpu.memref_squeeze %26 : memref<1x1x!tpu.dma_semaphore, #tpu.memory_space<semaphore_mem>> -> memref<!tpu.dma_semaphore, #tpu.memory_space<semaphore_mem>>
    tpu.wait_dma2 semaphore(%27 : memref<!tpu.dma_semaphore, #tpu.memory_space<semaphore_mem>>) src(%23 : memref<1x128xf32, #tpu.memory_space<any>>) dst(%25 : memref<1x128xf32, #tpu.memory_space<vmem>>)
    %c4_i32 = arith.constant 4 : i32
    %c0_i32_22 = arith.constant 0 : i32
    %c0_i32_23 = arith.constant 0 : i32
    %28 = tpu.memref_slice %arg3[%c0_i32_22, %c0_i32_23] : memref<64x128xf32, #tpu.memory_space<any>> -> memref<1x128xf32, #tpu.memory_space<any>>
    %c4_i32_24 = arith.constant 4 : i32
    %c0_i32_25 = arith.constant 0 : i32
    %29 = tpu.memref_slice %arg8[%0, %c4_i32_24, %c0_i32_25] : memref<2x8x128xf32, #tpu.memory_space<vmem>> -> memref<1x1x128xf32, #tpu.memory_space<vmem>>
    %30 = tpu.memref_squeeze %29 : memref<1x1x128xf32, #tpu.memory_space<vmem>> -> memref<1x128xf32, #tpu.memory_space<vmem>>
    %31 = tpu.memref_slice %arg9[%0, %c4_i32] : memref<2x8x!tpu.dma_semaphore, #tpu.memory_space<semaphore_mem>> -> memref<1x1x!tpu.dma_semaphore, #tpu.memory_space<semaphore_mem>>
    %32 = tpu.memref_squeeze %31 : memref<1x1x!tpu.dma_semaphore, #tpu.memory_space<semaphore_mem>> -> memref<!tpu.dma_semaphore, #tpu.memory_space<semaphore_mem>>
    tpu.wait_dma2 semaphore(%32 : memref<!tpu.dma_semaphore, #tpu.memory_space<semaphore_mem>>) src(%28 : memref<1x128xf32, #tpu.memory_space<any>>) dst(%30 : memref<1x128xf32, #tpu.memory_space<vmem>>)
    %c5_i32 = arith.constant 5 : i32
    %c0_i32_26 = arith.constant 0 : i32
    %c0_i32_27 = arith.constant 0 : i32
    %33 = tpu.memref_slice %arg3[%c0_i32_26, %c0_i32_27] : memref<64x128xf32, #tpu.memory_space<any>> -> memref<1x128xf32, #tpu.memory_space<any>>
    %c5_i32_28 = arith.constant 5 : i32
    %c0_i32_29 = arith.constant 0 : i32
    %34 = tpu.memref_slice %arg8[%0, %c5_i32_28, %c0_i32_29] : memref<2x8x128xf32, #tpu.memory_space<vmem>> -> memref<1x1x128xf32, #tpu.memory_space<vmem>>
    %35 = tpu.memref_squeeze %34 : memref<1x1x128xf32, #tpu.memory_space<vmem>> -> memref<1x128xf32, #tpu.memory_space<vmem>>
    %36 = tpu.memref_slice %arg9[%0, %c5_i32] : memref<2x8x!tpu.dma_semaphore, #tpu.memory_space<semaphore_mem>> -> memref<1x1x!tpu.dma_semaphore, #tpu.memory_space<semaphore_mem>>
    %37 = tpu.memref_squeeze %36 : memref<1x1x!tpu.dma_semaphore, #tpu.memory_space<semaphore_mem>> -> memref<!tpu.dma_semaphore, #tpu.memory_space<semaphore_mem>>
    tpu.wait_dma2 semaphore(%37 : memref<!tpu.dma_semaphore, #tpu.memory_space<semaphore_mem>>) src(%33 : memref<1x128xf32, #tpu.memory_space<any>>) dst(%35 : memref<1x128xf32, #tpu.memory_space<vmem>>)
    %c6_i32 = arith.constant 6 : i32
    %c0_i32_30 = arith.constant 0 : i32
    %c0_i32_31 = arith.constant 0 : i32
    %38 = tpu.memref_slice %arg3[%c0_i32_30, %c0_i32_31] : memref<64x128xf32, #tpu.memory_space<any>> -> memref<1x128xf32, #tpu.memory_space<any>>
    %c6_i32_32 = arith.constant 6 : i32
    %c0_i32_33 = arith.constant 0 : i32
    %39 = tpu.memref_slice %arg8[%0, %c6_i32_32, %c0_i32_33] : memref<2x8x128xf32, #tpu.memory_space<vmem>> -> memref<1x1x128xf32, #tpu.memory_space<vmem>>
    %40 = tpu.memref_squeeze %39 : memref<1x1x128xf32, #tpu.memory_space<vmem>> -> memref<1x128xf32, #tpu.memory_space<vmem>>
    %41 = tpu.memref_slice %arg9[%0, %c6_i32] : memref<2x8x!tpu.dma_semaphore, #tpu.memory_space<semaphore_mem>> -> memref<1x1x!tpu.dma_semaphore, #tpu.memory_space<semaphore_mem>>
    %42 = tpu.memref_squeeze %41 : memref<1x1x!tpu.dma_semaphore, #tpu.memory_space<semaphore_mem>> -> memref<!tpu.dma_semaphore, #tpu.memory_space<semaphore_mem>>
    tpu.wait_dma2 semaphore(%42 : memref<!tpu.dma_semaphore, #tpu.memory_space<semaphore_mem>>) src(%38 : memref<1x128xf32, #tpu.memory_space<any>>) dst(%40 : memref<1x128xf32, #tpu.memory_space<vmem>>)
    %c7_i32 = arith.constant 7 : i32
    %c0_i32_34 = arith.constant 0 : i32
    %c0_i32_35 = arith.constant 0 : i32
    %43 = tpu.memref_slice %arg3[%c0_i32_34, %c0_i32_35] : memref<64x128xf32, #tpu.memory_space<any>> -> memref<1x128xf32, #tpu.memory_space<any>>
    %c7_i32_36 = arith.constant 7 : i32
    %c0_i32_37 = arith.constant 0 : i32
    %44 = tpu.memref_slice %arg8[%0, %c7_i32_36, %c0_i32_37] : memref<2x8x128xf32, #tpu.memory_space<vmem>> -> memref<1x1x128xf32, #tpu.memory_space<vmem>>
    %45 = tpu.memref_squeeze %44 : memref<1x1x128xf32, #tpu.memory_space<vmem>> -> memref<1x128xf32, #tpu.memory_space<vmem>>
    %46 = tpu.memref_slice %arg9[%0, %c7_i32] : memref<2x8x!tpu.dma_semaphore, #tpu.memory_space<semaphore_mem>> -> memref<1x1x!tpu.dma_semaphore, #tpu.memory_space<semaphore_mem>>
    %47 = tpu.memref_squeeze %46 : memref<1x1x!tpu.dma_semaphore, #tpu.memory_space<semaphore_mem>> -> memref<!tpu.dma_semaphore, #tpu.memory_space<semaphore_mem>>
    tpu.wait_dma2 semaphore(%47 : memref<!tpu.dma_semaphore, #tpu.memory_space<semaphore_mem>>) src(%43 : memref<1x128xf32, #tpu.memory_space<any>>) dst(%45 : memref<1x128xf32, #tpu.memory_space<vmem>>)
    %48 = arith.index_cast %0 : i32 to index
    %c0 = arith.constant 0 : index
    %c0_38 = arith.constant 0 : index
    %49 = vector.load %arg8[%48, %c0, %c0_38] : memref<2x8x128xf32, #tpu.memory_space<vmem>>, vector<1x8x128xf32>
    %50 = vector.shape_cast %49 : vector<1x8x128xf32> to vector<8x128xf32>
    %c0_39 = arith.constant 0 : index
    %c0_40 = arith.constant 0 : index
    %51 = vector.load %arg4[%c0_39, %c0_40] : memref<8x128xf32, #tpu.memory_space<vmem>>, vector<8x128xf32>
    %52 = arith.addf %50, %51 : vector<8x128xf32>
    %cst = arith.constant dense<0.000000e+00> : vector<8xf32>
    %53 = vector.multi_reduction <add>, %52, %cst [1] : vector<8x128xf32> to vector<8xf32>
    %54 = vector.shape_cast %53 : vector<8xf32> to vector<8x1xf32>
    %cst_41 = arith.constant 1.280000e+02 : f32
    %55 = vector.broadcast %cst_41 : f32 to vector<8x1xf32>
    %56 = arith.divf %54, %55 : vector<8x1xf32>
    %57 = vector.broadcast %56 : vector<8x1xf32> to vector<8x128xf32>
    %58 = arith.subf %52, %57 : vector<8x128xf32>
    %59 = arith.mulf %58, %58 : vector<8x128xf32>
    %cst_42 = arith.constant dense<0.000000e+00> : vector<8xf32>
    %60 = vector.multi_reduction <add>, %59, %cst_42 [1] : vector<8x128xf32> to vector<8xf32>
    %61 = vector.shape_cast %60 : vector<8xf32> to vector<8x1xf32>
    %cst_43 = arith.constant 1.280000e+02 : f32
    %62 = vector.broadcast %cst_43 : f32 to vector<8x1xf32>
    %63 = arith.divf %61, %62 : vector<8x1xf32>
    %cst_44 = arith.constant 9.99999996E-13 : f32
    %64 = vector.broadcast %cst_44 : f32 to vector<8x1xf32>
    %65 = arith.addf %63, %64 : vector<8x1xf32>
    %66 = math.rsqrt %65 : vector<8x1xf32>
    %67 = vector.broadcast %66 : vector<8x1xf32> to vector<8x128xf32>
    %68 = arith.mulf %58, %67 : vector<8x128xf32>
    %c0_45 = arith.constant 0 : index
    %c0_46 = arith.constant 0 : index
    %69 = vector.load %arg5[%c0_45, %c0_46] : memref<1x128xf32, #tpu.memory_space<vmem>>, vector<1x128xf32>
    %70 = vector.broadcast %69 : vector<1x128xf32> to vector<8x128xf32>
    %71 = arith.mulf %68, %70 : vector<8x128xf32>
    %c0_47 = arith.constant 0 : index
    %c0_48 = arith.constant 0 : index
    %72 = vector.load %arg6[%c0_47, %c0_48] : memref<1x128xf32, #tpu.memory_space<vmem>>, vector<1x128xf32>
    %73 = vector.broadcast %72 : vector<1x128xf32> to vector<8x128xf32>
    %74 = arith.addf %71, %73 : vector<8x128xf32>
    %c0_49 = arith.constant 0 : index
    %c0_50 = arith.constant 0 : index
    %75 = vector.load %arg7[%c0_49, %c0_50] : memref<8x128xf32, #tpu.memory_space<vmem>>, vector<8x128xf32>
    tpu.vector_store %arg7[%c0_49, %c0_50], %74 {strides = array<i32>} : memref<8x128xf32, #tpu.memory_space<vmem>>, vector<8x128xf32>,
    return
  }
  func.func @transform_1(%arg0: i32, %arg1: i32, %arg2: memref<16xi32, #tpu.memory_space<smem>>) -> (i32, i32) {
    %c0_i32 = arith.constant 0 : i32
    %c0_i32_0 = arith.constant 0 : i32
    return %arg0, %c0_i32 : i32, i32
  }
  func.func @transform_2(%arg0: i32, %arg1: i32, %arg2: memref<16xi32, #tpu.memory_space<smem>>) -> (i32, i32) {
    %c0_i32 = arith.constant 0 : i32
    %c0_i32_0 = arith.constant 0 : i32
    %c0_i32_1 = arith.constant 0 : i32
    return %c0_i32, %c0_i32_0 : i32, i32
  }
  func.func @transform_3(%arg0: i32, %arg1: i32, %arg2: memref<16xi32, #tpu.memory_space<smem>>) -> (i32, i32) {
    %c0_i32 = arith.constant 0 : i32
    %c0_i32_0 = arith.constant 0 : i32
    %c0_i32_1 = arith.constant 0 : i32
    return %c0_i32, %c0_i32_0 : i32, i32
  }
  func.func @transform_4(%arg0: i32, %arg1: i32, %arg2: memref<16xi32, #tpu.memory_space<smem>>) -> (i32, i32) {
    %c0_i32 = arith.constant 0 : i32
    return %arg0, %arg1 : i32, i32
  }
}

</mosaic_0001>

<llo_original>
// kernel: tpu_custom_call.1
$region0: #{tpu_custom_call.1}
  #allocation0 [shape = 'u32[]', space=smem, size = 0x4, offset = 0x4, fixed_abs, tag = 'smem constant byte address 0x4 - core index']
  #allocation1 [shape = 'u32[72,128]{1,0:T(1,128)}', space=vmem, size = 0x9000, scoped, tag = 'internal scratch']
  #allocation2 [shape = 'f32[2,8,128]{2,1,0:T(8,128)}', space=vmem, size = 0x2000, scoped, tag = 'scratch operand']
  #allocation3 [shape = 's32[16]{0}', space=sflag, size = 0x40, scoped, tag = 'scratch operand']
  #allocation4 [shape = 's32[1]{0}', space=sflag, size = 0x4, scoped, tag = 'scoped memory for tpu_custom_call.1']
  #allocation5 [shape = 'u8[512]{0}', space=smem, size = 0x200, scoped, tag = 'prefetched SMEM operand 0']
  #allocation10 [shape = 's32[]', space=sflag, size = 0x4, offset = 0, fixed_abs, tag = 'sflag constant byte address 0x0 - dummy sync flag']
  #allocation11 [shape = 's32[]', space=sflag, size = 0x4, offset = 0, fixed_abs, tag = 'sflag constant byte address 0x0 - dummy sync flag']
  #allocation12 [shape = 'u32[]', space=smem, size = 0x4, offset = 0x44, fixed_abs, tag = 'smem constant byte address 0x44 - assertion arg 0']
  #allocation13 [shape = 'u32[]', space=smem, size = 0x4, offset = 0x48, fixed_abs, tag = 'smem constant byte address 0x48 - assertion arg 1']
  #allocation14 [shape = 's32[]', space=sflag, size = 0x4, offset = 0, fixed_abs, tag = 'sflag constant byte address 0x0 - dummy sync flag']
  #allocation15 [shape = 's32[]', space=sflag, size = 0x4, offset = 0, fixed_abs, tag = 'sflag constant byte address 0x0 - dummy sync flag']
  #allocation16 [shape = 's32[]', space=sflag, size = 0x4, offset = 0, fixed_abs, tag = 'sflag constant byte address 0x0 - dummy sync flag']
  #allocation17 [shape = 's32[]', space=sflag, size = 0x4, offset = 0, fixed_abs, tag = 'sflag constant byte address 0x0 - dummy sync flag']
  #allocation18 [shape = 's32[]', space=sflag, size = 0x4, offset = 0, fixed_abs, tag = 'sflag constant byte address 0x0 - dummy sync flag']
  #allocation19 [shape = 's32[]', space=sflag, size = 0x4, offset = 0, fixed_abs, tag = 'sflag constant byte address 0x0 - dummy sync flag']
  #allocation20 [shape = 's32[]', space=sflag, size = 0x4, offset = 0, fixed_abs, tag = 'sflag constant byte address 0x0 - dummy sync flag']
  #allocation21 [shape = 's32[]', space=sflag, size = 0x4, offset = 0, fixed_abs, tag = 'sflag constant byte address 0x0 - dummy sync flag']
  #allocation22 [shape = 's32[]', space=sflag, size = 0x4, offset = 0, fixed_abs, tag = 'sflag constant byte address 0x0 - dummy sync flag']
  #allocation23 [shape = 's32[]', space=sflag, size = 0x4, offset = 0, fixed_abs, tag = 'sflag constant byte address 0x0 - dummy sync flag']
  #allocation24 [shape = 's32[]', space=sflag, size = 0x4, offset = 0, fixed_abs, tag = 'sflag constant byte address 0x0 - dummy sync flag']
  #allocation25 [shape = 's32[]', space=sflag, size = 0x4, offset = 0, fixed_abs, tag = 'sflag constant byte address 0x0 - dummy sync flag']
  #allocation26 [shape = 's32[]', space=sflag, size = 0x4, offset = 0, fixed_abs, tag = 'sflag constant byte address 0x0 - dummy sync flag']
  #allocation27 [shape = 's32[]', space=sflag, size = 0x4, offset = 0, fixed_abs, tag = 'sflag constant byte address 0x0 - dummy sync flag']
  #allocation28 [shape = 's32[]', space=sflag, size = 0x4, offset = 0, fixed_abs, tag = 'sflag constant byte address 0x0 - dummy sync flag']
  #allocation29 [shape = 's32[]', space=sflag, size = 0x4, offset = 0, fixed_abs, tag = 'sflag constant byte address 0x0 - dummy sync flag']
  #allocation30 [shape = 's32[]', space=sflag, size = 0x4, offset = 0, fixed_abs, tag = 'sflag constant byte address 0x0 - dummy sync flag']
  #allocation31 [shape = 's32[]', space=sflag, size = 0x4, offset = 0, fixed_abs, tag = 'sflag constant byte address 0x0 - dummy sync flag']
  #allocation32 [shape = 's32[]', space=sflag, size = 0x4, offset = 0, fixed_abs, tag = 'sflag constant byte address 0x0 - dummy sync flag']
  #allocation33 [shape = 's32[]', space=sflag, size = 0x4, offset = 0, fixed_abs, tag = 'sflag constant byte address 0x0 - dummy sync flag']
  #allocation34 [shape = 's32[]', space=sflag, size = 0x4, offset = 0, fixed_abs, tag = 'sflag constant byte address 0x0 - dummy sync flag']
  #allocation35 [shape = 's32[]', space=sflag, size = 0x4, offset = 0, fixed_abs, tag = 'sflag constant byte address 0x0 - dummy sync flag']
  #allocation36 [shape = 's32[]', space=sflag, size = 0x4, offset = 0, fixed_abs, tag = 'sflag constant byte address 0x0 - dummy sync flag']
  #allocation37 [shape = 's32[]', space=sflag, size = 0x4, offset = 0, fixed_abs, tag = 'sflag constant byte address 0x0 - dummy sync flag']
  #allocation38 [shape = 's32[]', space=sflag, size = 0x4, offset = 0, fixed_abs, tag = 'sflag constant byte address 0x0 - dummy sync flag']
  #allocation39 [shape = 's32[]', space=sflag, size = 0x4, offset = 0, fixed_abs, tag = 'sflag constant byte address 0x0 - dummy sync flag']
  #allocation40 [shape = 's32[]', space=sflag, size = 0x4, offset = 0, fixed_abs, tag = 'sflag constant byte address 0x0 - dummy sync flag']
  #allocation41 [shape = 's32[]', space=sflag, size = 0x4, offset = 0, fixed_abs, tag = 'sflag constant byte address 0x0 - dummy sync flag']
  #allocation42 [shape = 's32[]', space=sflag, size = 0x4, offset = 0, fixed_abs, tag = 'sflag constant byte address 0x0 - dummy sync flag']
  #allocation43 [shape = 's32[]', space=sflag, size = 0x4, offset = 0, fixed_abs, tag = 'sflag constant byte address 0x0 - dummy sync flag']
  %s0 = inlined_call_operand.hbm [shape: s32[16], index: 0, kind: input, shape index: {}]
  %s1 = inlined_call_operand.hbm [shape: f32[64,128], index: 1, kind: input, shape index: {}]
  %s2 = inlined_call_operand.hbm [shape: f32[8,128], index: 2, kind: input, shape index: {}]
  %s3 = inlined_call_operand.vmem [shape: f32[1,128], index: 3, kind: input, shape index: {}]
  %s4 = inlined_call_operand.vmem [shape: f32[1,128], index: 4, kind: input, shape index: {}]
  %s5 = inlined_call_operand.hbm [shape: f32[8,256], index: 5, kind: output, shape index: {}]
  %s6 = sld [smem:[#allocation0]]
  $region121: #{tpu_custom_call.1} parent=0
    _
  %s8 = ssub.s32 1, %s6
  %s9 = scalar_select 0, %s8, %s6
  %s11 = sshll.u32 %s0, 4
  %s12 = int_to_ptr.hbm [resolvable:$true] %s11
  %14 = dma.hbm_to_smem %s12, 16, [#allocation5], [#allocation4]
  %16 = dma.done [#allocation4], 16
  %17 = sfence
  $region1: #{tpu_custom_call.1} parent=0
    #allocation6 [shape = 'u8[4096]{0}', space=vmem, size = 0x1000, scoped, tag = 'input window, operand 2, single buffered']
    #allocation7 [shape = 's32[2]{0}', space=sflag, size = 0x8, scoped, tag = 'scoped memory for tpu_custom_call.1']
    #allocation8 [shape = 's32[2]{0}', space=sflag, size = 0x8, scoped, tag = 'scoped memory for tpu_custom_call.1']
    #allocation9 [shape = 'u8[8192]{0}', space=vmem, size = 0x2000, scoped, tag = 'output window, operand 0']
    %18 = vsyncpa [#allocation7], 0
    %19 = vsyncpa [#allocation8], 0
    %s20 = scalar_lea.sflag [#allocation8], 1
    %21 = vsyncpa %s20, 0
    loop: start=0, step=1, limit=4
    $region2: #{tpu_custom_call.1} parent=1 // loop_pre_header
      _
    $region3: #{tpu_custom_call.1} parent=1 // loop_header
      %s23 = sphi 0, %s27
      %p24 = scmp.ge.s32.totalorder %s23, 4
      %s30 = sphi 0, %s42
      %s31 = sphi 0, %s38
      %s32 = sphi 0, %s30
      %s33 = sphi 0, %s31
      %s34 = sphi 0, %s32
      %s35 = sphi 0, %s33
      %s45 = sphi 0, %s47
      %s48 = sphi 0, %s45
      %s49 = sphi 0, %s48
      %s65 = sphi 0, %s49
      %s69 = sphi 0, %s69
      %s71 = sphi 0, %s69
      %s72 = sphi 0, %s71
      %s86 = sphi 0, %s72
      %s90 = sphi 0, %s90
      %s92 = sphi 0, %s90
      %s93 = sphi 0, %s92
      %s107 = sphi 0, %s93
      %s115 = sphi 0, %s117
      %s118 = sphi 0, %s115
      %s119 = sphi 0, %s118
      %s135 = sphi 0, %s119
    $region4: #{tpu_custom_call.1} parent=1 // loop_header_branch
      %26 = sbr.rel (%p24) target = $region8
    $region5: #{tpu_custom_call.1} parent=1 // loop_body
      %s28 = ssub.s32 %s23, 1
      %s29 = ssub.s32 %s23, 2
      %s36 = sadd.s32 1, %s31
      %p37 = scmp.ge.s32.totalorder %s36, 2
      %s38 = scalar_select %p37, 0, %s36
      %s39 = sadd.s32 1, %s30
      %s40 = scalar_select %p37, %s39, %s30
      %p41 = scmp.ge.s32.totalorder %s40, 1
      %s42 = scalar_select %p41, 0, %s40
      %s43 = ssub.s32 %s30, %s42
      %p44 = scmp.eq.s32.totalorder %s43, 0
      %s46 = sadd.s32 %s45, 1
      %s47 = scalar_select %p44, %s45, %s46
      %p50 = pneg %p44
      %p51 = scmp.eq.s32.totalorder %s23, 1
      %p52 = por %p50, %p51
      %p53 = scmp.ne.s32.totalorder %s45, %s48
      %p54 = scmp.eq.s32.totalorder %s23, 0
      %p55 = por %p53, %p54
      %p56 = scmp.ne.s32.totalorder %s45, %s48
      %p57 = scmp.eq.s32.totalorder %s28, 1
      %p58 = por %p56, %p57
      %p59 = scmp.ne.s32.totalorder %s48, %s49
      %p60 = scmp.eq.s32.totalorder %s28, 0
      %p61 = por %p59, %p60
      %p62 = scmp.ne.s32.totalorder %s48, %s49
      %p63 = scmp.eq.s32.totalorder %s29, 1
      %p64 = por %p62, %p63
      %p66 = scmp.ne.s32.totalorder %s49, %s65
      %p67 = scmp.eq.s32.totalorder %s29, 0
      %p68 = por %p66, %p67
      %s70 = sadd.s32 %s69, 1
      %p73 = scmp.eq.s32.totalorder %s23, 1
      %p74 = scmp.ne.s32.totalorder %s69, %s71
      %p75 = scmp.eq.s32.totalorder %s23, 0
      %p76 = por %p74, %p75
      %p77 = scmp.ne.s32.totalorder %s69, %s71
      %p78 = scmp.eq.s32.totalorder %s28, 1
      %p79 = por %p77, %p78
      %p80 = scmp.ne.s32.totalorder %s71, %s72
      %p81 = scmp.eq.s32.totalorder %s28, 0
      %p82 = por %p80, %p81
      %p83 = scmp.ne.s32.totalorder %s71, %s72
      %p84 = scmp.eq.s32.totalorder %s29, 1
      %p85 = por %p83, %p84
      %p87 = scmp.ne.s32.totalorder %s72, %s86
      %p88 = scmp.eq.s32.totalorder %s29, 0
      %p89 = por %p87, %p88
      %s91 = sadd.s32 %s90, 1
      %p94 = scmp.eq.s32.totalorder %s23, 1
      %p95 = scmp.ne.s32.totalorder %s90, %s92
      %p96 = scmp.eq.s32.totalorder %s23, 0
      %p97 = por %p95, %p96
      %p98 = scmp.ne.s32.totalorder %s90, %s92
      %p99 = scmp.eq.s32.totalorder %s28, 1
      %p100 = por %p98, %p99
      %p101 = scmp.ne.s32.totalorder %s92, %s93
      %p102 = scmp.eq.s32.totalorder %s28, 0
      %p103 = por %p101, %p102
      %p104 = scmp.ne.s32.totalorder %s92, %s93
      %p105 = scmp.eq.s32.totalorder %s29, 1
      %p106 = por %p104, %p105
      %p108 = scmp.ne.s32.totalorder %s93, %s107
      %p109 = scmp.eq.s32.totalorder %s29, 0
      %p110 = por %p108, %p109
      %s111 = ssub.s32 %s30, %s42
      %s112 = ssub.s32 %s31, %s38
      %s113 = sor.u32 %s111, %s112
      %p114 = scmp.eq.s32.totalorder %s113, 0
      %s116 = sadd.s32 %s115, 1
      %s117 = scalar_select %p114, %s115, %s116
      %p120 = pneg %p114
      %p121 = scmp.eq.s32.totalorder %s23, 1
      %p122 = por %p120, %p121
      %p123 = scmp.ne.s32.totalorder %s115, %s118
      %p124 = scmp.eq.s32.totalorder %s23, 0
      %p125 = por %p123, %p124
      %p126 = scmp.ne.s32.totalorder %s115, %s118
      %p127 = scmp.eq.s32.totalorder %s28, 1
      %p128 = por %p126, %p127
      %p129 = scmp.ne.s32.totalorder %s118, %s119
      %p130 = scmp.eq.s32.totalorder %s28, 0
      %p131 = por %p129, %p130
      %p132 = scmp.ne.s32.totalorder %s118, %s119
      %p133 = scmp.eq.s32.totalorder %s29, 1
      %p134 = por %p132, %p133
      %p136 = scmp.ne.s32.totalorder %s119, %s135
      %p137 = scmp.eq.s32.totalorder %s29, 0
      %p138 = por %p136, %p137
      %p139 = scmp.le.s32.totalorder 1, %s23
      %p140 = scmp.lt.s32.totalorder %s23, 3
      %p141 = pnand %p139, %p140
      %p142 = pneg %p141
      // Predicated region
      $region9: #{tpu_custom_call.1} parent=5 // pred_check
        _
      $region10: #{tpu_custom_call.1} parent=5 // pred_check_branch
        %144 = sbr.rel (%p141) target = $region12
      $region11: #{tpu_custom_call.1} parent=5 // pred_region
        %s145 = ssub.s32 %s23, 1
        // Predicated region
        $region13: #{tpu_custom_call.1} parent=11 // pred_check
          %p146 = pneg %p61
        $region14: #{tpu_custom_call.1} parent=11 // pred_check_branch
          %148 = sbr.rel (%p146) target = $region16
        $region15: #{tpu_custom_call.1} parent=11 // pred_region
          %150 = vsyncadd [#allocation7], 0
          %s151 = smul.addr %s32, 8
          %s152 = scalar_lea.hbm %s2, %s151
          %s154 = sshll.u32 %s152, 4
          %s155 = int_to_ptr.hbm [resolvable:$true] %s154
          %s156 = sshll.u32 [#allocation6], 4
          %s157 = int_to_ptr.vmem [resolvable:$true] %s156
          %159 = dma.hbm_to_vmem [thread:$0]  %s155, 128, %s157, [#allocation7]
        $region16: #{tpu_custom_call.1} parent=11 // pred_fallthru
          _
        // Predicated region
        $region17: #{tpu_custom_call.1} parent=11 // pred_check
          %p160 = pneg %p82
        $region18: #{tpu_custom_call.1} parent=11 // pred_check_branch
          %162 = sbr.rel (%p160) target = $region20
        $region19: #{tpu_custom_call.1} parent=11 // pred_region
          _
        $region20: #{tpu_custom_call.1} parent=11 // pred_fallthru
          _
        // Predicated region
        $region21: #{tpu_custom_call.1} parent=11 // pred_check
          %p163 = pneg %p103
        $region22: #{tpu_custom_call.1} parent=11 // pred_check_branch
          %165 = sbr.rel (%p163) target = $region24
        $region23: #{tpu_custom_call.1} parent=11 // pred_region
          _
        $region24: #{tpu_custom_call.1} parent=11 // pred_fallthru
          _
      $region12: #{tpu_custom_call.1} parent=5 // pred_fallthru
        _
      %p166 = scmp.lt.s32.totalorder %s23, 2
      // Predicated region
      $region25: #{tpu_custom_call.1} parent=5 // pred_check
        %p167 = pneg %p166
      $region26: #{tpu_custom_call.1} parent=5 // pred_check_branch
        %169 = sbr.rel (%p167) target = $region28
      $region27: #{tpu_custom_call.1} parent=5 // pred_region
        _
      $region28: #{tpu_custom_call.1} parent=5 // pred_fallthru
        _
      %p170 = scmp.le.s32.totalorder 1, %s23
      %p171 = scmp.lt.s32.totalorder %s23, 3
      %p172 = pnand %p170, %p171
      %p173 = pneg %p172
      // Predicated region
      $region29: #{tpu_custom_call.1} parent=5 // pred_check
        _
      $region30: #{tpu_custom_call.1} parent=5 // pred_check_branch
        %175 = sbr.rel (%p172) target = $region32
      $region31: #{tpu_custom_call.1} parent=5 // pred_region
        %s176 = ssub.s32 %s23, 1
        // Predicated region
        $region33: #{tpu_custom_call.1} parent=31 // pred_check
          %p177 = pneg %p61
        $region34: #{tpu_custom_call.1} parent=31 // pred_check_branch
          %179 = sbr.rel (%p177) target = $region36
        $region35: #{tpu_custom_call.1} parent=31 // pred_region
          %181 = dma.done [#allocation7], 128
        $region36: #{tpu_custom_call.1} parent=31 // pred_fallthru
          _
        %p182 = pneg %p61
        %p183 = pneg %p58
        %p184 = pneg %p82
        %p185 = pneg %p79
        %p186 = pneg %p103
        %p187 = pneg %p100
        %p188 = pneg %p131
        %p189 = pneg %p128
        %s190 = sand.u32 %s118, 1
        %s191 = scalar_lea.sflag [#allocation8], %s190
        %s192 = sand.u32 %s118, 1
        %s193 = smul.addr %s192, 8
        %s194 = scalar_lea.vmem [#allocation9], %s193
        %s195 = sand.u32 %s33, 1
        %p196 = scmp.eq.s32.totalorder %s33, 0
        // Predicated region
        $region37: #{tpu_custom_call.1} parent=31 // pred_check
          %p197 = pneg %p196
        $region38: #{tpu_custom_call.1} parent=31 // pred_check_branch
          %199 = sbr.rel (%p197) target = $region40
        $region39: #{tpu_custom_call.1} parent=31 // pred_region
          %s200 = smul.u32 %s33, 8
          %s201 = smul.u32 %s32, 8
          %s202 = sadd.s32 %s200, %s201
          %s203 = sld [smem:[#allocation5 + %s202]]
          %s204 = scalar_lea.hbm %s1, %s203
          %s205 = smul.u32 %s195, 8
          %s206 = scalar_lea.vmem [#allocation2], %s205
          %s207 = scalar_lea.sflag [#allocation3], %s205
          // Predicated region
          $region41: #{tpu_custom_call.1} parent=39 // pred_check
            _
          $region42: #{tpu_custom_call.1} parent=39 // pred_check_branch
            %209 = sbr.rel target = $region44
          $region43: #{tpu_custom_call.1} parent=39 // pred_region
            %210 = sst [smem:[#allocation12]] [#allocation11]
            %211 = sst [smem:[#allocation13]] [#allocation10]
          $region44: #{tpu_custom_call.1} parent=39 // pred_fallthru
            _
          %213 = shalt.err (0)
          %s215 = sshll.u32 %s204, 4
          %s216 = int_to_ptr.hbm [resolvable:$true] %s215
          %s217 = sshll.u32 %s206, 4
          %s218 = int_to_ptr.vmem [resolvable:$true] %s217
          %220 = dma.hbm_to_vmem [thread:$0]  %s216, 16, %s218, %s207
          %s221 = sadd.s32 %s202, 1
          %s222 = sld [smem:[#allocation5 + %s221]]
          %s223 = scalar_lea.hbm %s1, %s222
          %s224 = sadd.s32 1, %s205
          %s225 = scalar_lea.vmem [#allocation2], %s224
          %s226 = scalar_lea.sflag [#allocation3], %s224
          // Predicated region
          $region45: #{tpu_custom_call.1} parent=39 // pred_check
            _
          $region46: #{tpu_custom_call.1} parent=39 // pred_check_branch
            %228 = sbr.rel target = $region48
          $region47: #{tpu_custom_call.1} parent=39 // pred_region
            %229 = sst [smem:[#allocation12]] [#allocation15]
            %230 = sst [smem:[#allocation13]] [#allocation14]
          $region48: #{tpu_custom_call.1} parent=39 // pred_fallthru
            _
          %232 = shalt.err (0)
          %s234 = sshll.u32 %s223, 4
          %s235 = int_to_ptr.hbm [resolvable:$true] %s234
          %s236 = sshll.u32 %s225, 4
          %s237 = int_to_ptr.vmem [resolvable:$true] %s236
          %239 = dma.hbm_to_vmem [thread:$0]  %s235, 16, %s237, %s226
          %s240 = sadd.s32 %s202, 2
          %s241 = sld [smem:[#allocation5 + %s240]]
          %s242 = scalar_lea.hbm %s1, %s241
          %s243 = sadd.s32 2, %s205
          %s244 = scalar_lea.vmem [#allocation2], %s243
          %s245 = scalar_lea.sflag [#allocation3], %s243
          // Predicated region
          $region49: #{tpu_custom_call.1} parent=39 // pred_check
            _
          $region50: #{tpu_custom_call.1} parent=39 // pred_check_branch
            %247 = sbr.rel target = $region52
          $region51: #{tpu_custom_call.1} parent=39 // pred_region
            %248 = sst [smem:[#allocation12]] [#allocation17]
            %249 = sst [smem:[#allocation13]] [#allocation16]
          $region52: #{tpu_custom_call.1} parent=39 // pred_fallthru
            _
          %251 = shalt.err (0)
          %s253 = sshll.u32 %s242, 4
          %s254 = int_to_ptr.hbm [resolvable:$true] %s253
          %s255 = sshll.u32 %s244, 4
          %s256 = int_to_ptr.vmem [resolvable:$true] %s255
          %258 = dma.hbm_to_vmem [thread:$0]  %s254, 16, %s256, %s245
          %s259 = sadd.s32 %s202, 3
          %s260 = sld [smem:[#allocation5 + %s259]]
          %s261 = scalar_lea.hbm %s1, %s260
          %s262 = sadd.s32 3, %s205
          %s263 = scalar_lea.vmem [#allocation2], %s262
          %s264 = scalar_lea.sflag [#allocation3], %s262
          // Predicated region
          $region53: #{tpu_custom_call.1} parent=39 // pred_check
            _
          $region54: #{tpu_custom_call.1} parent=39 // pred_check_branch
            %266 = sbr.rel target = $region56
          $region55: #{tpu_custom_call.1} parent=39 // pred_region
            %267 = sst [smem:[#allocation12]] [#allocation19]
            %268 = sst [smem:[#allocation13]] [#allocation18]
          $region56: #{tpu_custom_call.1} parent=39 // pred_fallthru
            _
          %270 = shalt.err (0)
          %s272 = sshll.u32 %s261, 4
          %s273 = int_to_ptr.hbm [resolvable:$true] %s272
          %s274 = sshll.u32 %s263, 4
          %s275 = int_to_ptr.vmem [resolvable:$true] %s274
          %277 = dma.hbm_to_vmem [thread:$0]  %s273, 16, %s275, %s264
          %s278 = sadd.s32 %s202, 4
          %s279 = sld [smem:[#allocation5 + %s278]]
          %s280 = scalar_lea.hbm %s1, %s279
          %s281 = sadd.s32 4, %s205
          %s282 = scalar_lea.vmem [#allocation2], %s281
          %s283 = scalar_lea.sflag [#allocation3], %s281
          // Predicated region
          $region57: #{tpu_custom_call.1} parent=39 // pred_check
            _
          $region58: #{tpu_custom_call.1} parent=39 // pred_check_branch
            %285 = sbr.rel target = $region60
          $region59: #{tpu_custom_call.1} parent=39 // pred_region
            %286 = sst [smem:[#allocation12]] [#allocation21]
            %287 = sst [smem:[#allocation13]] [#allocation20]
          $region60: #{tpu_custom_call.1} parent=39 // pred_fallthru
            _
          %289 = shalt.err (0)
          %s291 = sshll.u32 %s280, 4
          %s292 = int_to_ptr.hbm [resolvable:$true] %s291
          %s293 = sshll.u32 %s282, 4
          %s294 = int_to_ptr.vmem [resolvable:$true] %s293
          %296 = dma.hbm_to_vmem [thread:$0]  %s292, 16, %s294, %s283
          %s297 = sadd.s32 %s202, 5
          %s298 = sld [smem:[#allocation5 + %s297]]
          %s299 = scalar_lea.hbm %s1, %s298
          %s300 = sadd.s32 5, %s205
          %s301 = scalar_lea.vmem [#allocation2], %s300
          %s302 = scalar_lea.sflag [#allocation3], %s300
          // Predicated region
          $region61: #{tpu_custom_call.1} parent=39 // pred_check
            _
          $region62: #{tpu_custom_call.1} parent=39 // pred_check_branch
            %304 = sbr.rel target = $region64
          $region63: #{tpu_custom_call.1} parent=39 // pred_region
            %305 = sst [smem:[#allocation12]] [#allocation23]
            %306 = sst [smem:[#allocation13]] [#allocation22]
          $region64: #{tpu_custom_call.1} parent=39 // pred_fallthru
            _
          %308 = shalt.err (0)
          %s310 = sshll.u32 %s299, 4
          %s311 = int_to_ptr.hbm [resolvable:$true] %s310
          %s312 = sshll.u32 %s301, 4
          %s313 = int_to_ptr.vmem [resolvable:$true] %s312
          %315 = dma.hbm_to_vmem [thread:$0]  %s311, 16, %s313, %s302
          %s316 = sadd.s32 %s202, 6
          %s317 = sld [smem:[#allocation5 + %s316]]
          %s318 = scalar_lea.hbm %s1, %s317
          %s319 = sadd.s32 6, %s205
          %s320 = scalar_lea.vmem [#allocation2], %s319
          %s321 = scalar_lea.sflag [#allocation3], %s319
          // Predicated region
          $region65: #{tpu_custom_call.1} parent=39 // pred_check
            _
          $region66: #{tpu_custom_call.1} parent=39 // pred_check_branch
            %323 = sbr.rel target = $region68
          $region67: #{tpu_custom_call.1} parent=39 // pred_region
            %324 = sst [smem:[#allocation12]] [#allocation25]
            %325 = sst [smem:[#allocation13]] [#allocation24]
          $region68: #{tpu_custom_call.1} parent=39 // pred_fallthru
            _
          %327 = shalt.err (0)
          %s329 = sshll.u32 %s318, 4
          %s330 = int_to_ptr.hbm [resolvable:$true] %s329
          %s331 = sshll.u32 %s320, 4
          %s332 = int_to_ptr.vmem [resolvable:$true] %s331
          %334 = dma.hbm_to_vmem [thread:$0]  %s330, 16, %s332, %s321
          %s335 = sadd.s32 %s202, 7
          %s336 = sld [smem:[#allocation5 + %s335]]
          %s337 = scalar_lea.hbm %s1, %s336
          %s338 = sadd.s32 7, %s205
          %s339 = scalar_lea.vmem [#allocation2], %s338
          %s340 = scalar_lea.sflag [#allocation3], %s338
          // Predicated region
          $region69: #{tpu_custom_call.1} parent=39 // pred_check
            _
          $region70: #{tpu_custom_call.1} parent=39 // pred_check_branch
            %342 = sbr.rel target = $region72
          $region71: #{tpu_custom_call.1} parent=39 // pred_region
            %343 = sst [smem:[#allocation12]] [#allocation27]
            %344 = sst [smem:[#allocation13]] [#allocation26]
          $region72: #{tpu_custom_call.1} parent=39 // pred_fallthru
            _
          %346 = shalt.err (0)
          %s348 = sshll.u32 %s337, 4
          %s349 = int_to_ptr.hbm [resolvable:$true] %s348
          %s350 = sshll.u32 %s339, 4
          %s351 = int_to_ptr.vmem [resolvable:$true] %s350
          %353 = dma.hbm_to_vmem [thread:$0]  %s349, 16, %s351, %s340
        $region40: #{tpu_custom_call.1} parent=31 // pred_fallthru
          _
        %s354 = sadd.s32 %s33, 1
        %p355 = scmp.lt.s32.totalorder %s354, 2
        // Predicated region
        $region73: #{tpu_custom_call.1} parent=31 // pred_check
          %p356 = pneg %p355
        $region74: #{tpu_custom_call.1} parent=31 // pred_check_branch
          %358 = sbr.rel (%p356) target = $region76
        $region75: #{tpu_custom_call.1} parent=31 // pred_region
          %s359 = ssub.s32 1, %s195
          %s360 = smul.u32 %s354, 8
          %s361 = smul.u32 %s32, 8
          %s362 = sadd.s32 %s360, %s361
          %s363 = sld [smem:[#allocation5 + %s362]]
          %s364 = scalar_lea.hbm %s1, %s363
          %s365 = smul.u32 %s359, 8
          %s366 = scalar_lea.vmem [#allocation2], %s365
          %s367 = scalar_lea.sflag [#allocation3], %s365
          // Predicated region
          $region77: #{tpu_custom_call.1} parent=75 // pred_check
            _
          $region78: #{tpu_custom_call.1} parent=75 // pred_check_branch
            %369 = sbr.rel target = $region80
          $region79: #{tpu_custom_call.1} parent=75 // pred_region
            %370 = sst [smem:[#allocation12]] [#allocation29]
            %371 = sst [smem:[#allocation13]] [#allocation28]
          $region80: #{tpu_custom_call.1} parent=75 // pred_fallthru
            _
          %373 = shalt.err (0)
          %s375 = sshll.u32 %s364, 4
          %s376 = int_to_ptr.hbm [resolvable:$true] %s375
          %s377 = sshll.u32 %s366, 4
          %s378 = int_to_ptr.vmem [resolvable:$true] %s377
          %380 = dma.hbm_to_vmem [thread:$0]  %s376, 16, %s378, %s367
          %s381 = sadd.s32 %s362, 1
          %s382 = sld [smem:[#allocation5 + %s381]]
          %s383 = scalar_lea.hbm %s1, %s382
          %s384 = sadd.s32 1, %s365
          %s385 = scalar_lea.vmem [#allocation2], %s384
          %s386 = scalar_lea.sflag [#allocation3], %s384
          // Predicated region
          $region81: #{tpu_custom_call.1} parent=75 // pred_check
            _
          $region82: #{tpu_custom_call.1} parent=75 // pred_check_branch
            %388 = sbr.rel target = $region84
          $region83: #{tpu_custom_call.1} parent=75 // pred_region
            %389 = sst [smem:[#allocation12]] [#allocation31]
            %390 = sst [smem:[#allocation13]] [#allocation30]
          $region84: #{tpu_custom_call.1} parent=75 // pred_fallthru
            _
          %392 = shalt.err (0)
          %s394 = sshll.u32 %s383, 4
          %s395 = int_to_ptr.hbm [resolvable:$true] %s394
          %s396 = sshll.u32 %s385, 4
          %s397 = int_to_ptr.vmem [resolvable:$true] %s396
          %399 = dma.hbm_to_vmem [thread:$0]  %s395, 16, %s397, %s386
          %s400 = sadd.s32 %s362, 2
          %s401 = sld [smem:[#allocation5 + %s400]]
          %s402 = scalar_lea.hbm %s1, %s401
          %s403 = sadd.s32 2, %s365
          %s404 = scalar_lea.vmem [#allocation2], %s403
          %s405 = scalar_lea.sflag [#allocation3], %s403
          // Predicated region
          $region85: #{tpu_custom_call.1} parent=75 // pred_check
            _
          $region86: #{tpu_custom_call.1} parent=75 // pred_check_branch
            %407 = sbr.rel target = $region88
          $region87: #{tpu_custom_call.1} parent=75 // pred_region
            %408 = sst [smem:[#allocation12]] [#allocation33]
            %409 = sst [smem:[#allocation13]] [#allocation32]
          $region88: #{tpu_custom_call.1} parent=75 // pred_fallthru
            _
          %411 = shalt.err (0)
          %s413 = sshll.u32 %s402, 4
          %s414 = int_to_ptr.hbm [resolvable:$true] %s413
          %s415 = sshll.u32 %s404, 4
          %s416 = int_to_ptr.vmem [resolvable:$true] %s415
          %418 = dma.hbm_to_vmem [thread:$0]  %s414, 16, %s416, %s405
          %s419 = sadd.s32 %s362, 3
          %s420 = sld [smem:[#allocation5 + %s419]]
          %s421 = scalar_lea.hbm %s1, %s420
          %s422 = sadd.s32 3, %s365
          %s423 = scalar_lea.vmem [#allocation2], %s422
          %s424 = scalar_lea.sflag [#allocation3], %s422
          // Predicated region
          $region89: #{tpu_custom_call.1} parent=75 // pred_check
            _
          $region90: #{tpu_custom_call.1} parent=75 // pred_check_branch
            %426 = sbr.rel target = $region92
          $region91: #{tpu_custom_call.1} parent=75 // pred_region
            %427 = sst [smem:[#allocation12]] [#allocation35]
            %428 = sst [smem:[#allocation13]] [#allocation34]
          $region92: #{tpu_custom_call.1} parent=75 // pred_fallthru
            _
          %430 = shalt.err (0)
          %s432 = sshll.u32 %s421, 4
          %s433 = int_to_ptr.hbm [resolvable:$true] %s432
          %s434 = sshll.u32 %s423, 4
          %s435 = int_to_ptr.vmem [resolvable:$true] %s434
          %437 = dma.hbm_to_vmem [thread:$0]  %s433, 16, %s435, %s424
          %s438 = sadd.s32 %s362, 4
          %s439 = sld [smem:[#allocation5 + %s438]]
          %s440 = scalar_lea.hbm %s1, %s439
          %s441 = sadd.s32 4, %s365
          %s442 = scalar_lea.vmem [#allocation2], %s441
          %s443 = scalar_lea.sflag [#allocation3], %s441
          // Predicated region
          $region93: #{tpu_custom_call.1} parent=75 // pred_check
            _
          $region94: #{tpu_custom_call.1} parent=75 // pred_check_branch
            %445 = sbr.rel target = $region96
          $region95: #{tpu_custom_call.1} parent=75 // pred_region
            %446 = sst [smem:[#allocation12]] [#allocation37]
            %447 = sst [smem:[#allocation13]] [#allocation36]
          $region96: #{tpu_custom_call.1} parent=75 // pred_fallthru
            _
          %449 = shalt.err (0)
          %s451 = sshll.u32 %s440, 4
          %s452 = int_to_ptr.hbm [resolvable:$true] %s451
          %s453 = sshll.u32 %s442, 4
          %s454 = int_to_ptr.vmem [resolvable:$true] %s453
          %456 = dma.hbm_to_vmem [thread:$0]  %s452, 16, %s454, %s443
          %s457 = sadd.s32 %s362, 5
          %s458 = sld [smem:[#allocation5 + %s457]]
          %s459 = scalar_lea.hbm %s1, %s458
          %s460 = sadd.s32 5, %s365
          %s461 = scalar_lea.vmem [#allocation2], %s460
          %s462 = scalar_lea.sflag [#allocation3], %s460
          // Predicated region
          $region97: #{tpu_custom_call.1} parent=75 // pred_check
            _
          $region98: #{tpu_custom_call.1} parent=75 // pred_check_branch
            %464 = sbr.rel target = $region100
          $region99: #{tpu_custom_call.1} parent=75 // pred_region
            %465 = sst [smem:[#allocation12]] [#allocation39]
            %466 = sst [smem:[#allocation13]] [#allocation38]
          $region100: #{tpu_custom_call.1} parent=75 // pred_fallthru
            _
          %468 = shalt.err (0)
          %s470 = sshll.u32 %s459, 4
          %s471 = int_to_ptr.hbm [resolvable:$true] %s470
          %s472 = sshll.u32 %s461, 4
          %s473 = int_to_ptr.vmem [resolvable:$true] %s472
          %475 = dma.hbm_to_vmem [thread:$0]  %s471, 16, %s473, %s462
          %s476 = sadd.s32 %s362, 6
          %s477 = sld [smem:[#allocation5 + %s476]]
          %s478 = scalar_lea.hbm %s1, %s477
          %s479 = sadd.s32 6, %s365
          %s480 = scalar_lea.vmem [#allocation2], %s479
          %s481 = scalar_lea.sflag [#allocation3], %s479
          // Predicated region
          $region101: #{tpu_custom_call.1} parent=75 // pred_check
            _
          $region102: #{tpu_custom_call.1} parent=75 // pred_check_branch
            %483 = sbr.rel target = $region104
          $region103: #{tpu_custom_call.1} parent=75 // pred_region
            %484 = sst [smem:[#allocation12]] [#allocation41]
            %485 = sst [smem:[#allocation13]] [#allocation40]
          $region104: #{tpu_custom_call.1} parent=75 // pred_fallthru
            _
          %487 = shalt.err (0)
          %s489 = sshll.u32 %s478, 4
          %s490 = int_to_ptr.hbm [resolvable:$true] %s489
          %s491 = sshll.u32 %s480, 4
          %s492 = int_to_ptr.vmem [resolvable:$true] %s491
          %494 = dma.hbm_to_vmem [thread:$0]  %s490, 16, %s492, %s481
          %s495 = sadd.s32 %s362, 7
          %s496 = sld [smem:[#allocation5 + %s495]]
          %s497 = scalar_lea.hbm %s1, %s496
          %s498 = sadd.s32 7, %s365
          %s499 = scalar_lea.vmem [#allocation2], %s498
          %s500 = scalar_lea.sflag [#allocation3], %s498
          // Predicated region
          $region105: #{tpu_custom_call.1} parent=75 // pred_check
            _
          $region106: #{tpu_custom_call.1} parent=75 // pred_check_branch
            %502 = sbr.rel target = $region108
          $region107: #{tpu_custom_call.1} parent=75 // pred_region
            %503 = sst [smem:[#allocation12]] [#allocation43]
            %504 = sst [smem:[#allocation13]] [#allocation42]
          $region108: #{tpu_custom_call.1} parent=75 // pred_fallthru
            _
          %506 = shalt.err (0)
          %s508 = sshll.u32 %s497, 4
          %s509 = int_to_ptr.hbm [resolvable:$true] %s508
          %s510 = sshll.u32 %s499, 4
          %s511 = int_to_ptr.vmem [resolvable:$true] %s510
          %513 = dma.hbm_to_vmem [thread:$0]  %s509, 16, %s511, %s500
        $region76: #{tpu_custom_call.1} parent=31 // pred_fallthru
          _
        %s514 = smul.u32 %s195, 8
        %s515 = scalar_lea.sflag [#allocation3], %s514
        %s516 = smul.u32 1, 1
        %s517 = sshll.u32 %s516, 4
        %518 = dma.done %s515, %s517
        %s519 = sadd.s32 1, %s514
        %s520 = scalar_lea.sflag [#allocation3], %s519
        %s521 = sshll.u32 %s516, 4
        %522 = dma.done %s520, %s521
        %s523 = sadd.s32 2, %s514
        %s524 = scalar_lea.sflag [#allocation3], %s523
        %s525 = sshll.u32 %s516, 4
        %526 = dma.done %s524, %s525
        %s527 = sadd.s32 3, %s514
        %s528 = scalar_lea.sflag [#allocation3], %s527
        %s529 = sshll.u32 %s516, 4
        %530 = dma.done %s528, %s529
        %s531 = sadd.s32 4, %s514
        %s532 = scalar_lea.sflag [#allocation3], %s531
        %s533 = sshll.u32 %s516, 4
        %534 = dma.done %s532, %s533
        %s535 = sadd.s32 5, %s514
        %s536 = scalar_lea.sflag [#allocation3], %s535
        %s537 = sshll.u32 %s516, 4
        %538 = dma.done %s536, %s537
        %s539 = sadd.s32 6, %s514
        %s540 = scalar_lea.sflag [#allocation3], %s539
        %s541 = sshll.u32 %s516, 4
        %542 = dma.done %s540, %s541
        %s543 = sadd.s32 7, %s514
        %s544 = scalar_lea.sflag [#allocation3], %s543
        %s545 = sshll.u32 %s516, 4
        %546 = dma.done %s544, %s545
        %s547 = scalar_lea.vmem [#allocation2], %s514
        %v548 = vld [vmem:[%s547] sm:$0xff]
        %v549 = vld [vmem:[#allocation6] sm:$0xff]
        %v550 = vadd.f32 %v548, %v549
        %551 = vadd.xlane.f32.xlu0 %v550
        %v552 = vpop.xlane.xlu0 %551
        %v553 = vrcp.pop 128.0
        %v554 = vmul.f32 128.0, %v553
        %v555 = vsub.f32 1.0, %v554
        %v556 = vmul.f32 %v553, %v555
        %v557 = vadd.f32 %v553, %v556
        %vm558 = vweird.f32 %v553
        %v559 = vsel %vm558, %v553, %v557
        %v560 = vmul.f32 %v552, %v559
        %v561 = vsub.f32 %v550, %v560
        %v562 = vmul.f32 %v561, %v561
        %563 = vadd.xlane.f32.xlu0 %v562
        %v564 = vpop.xlane.xlu0 %563
        %v565 = vmul.f32 %v564, %v559
        %v566 = vadd.f32 %v565, 1e-12
        %v567 = vrsqrt.pop %v566
        %v568 = vmul.f32 %v567, %v566
        %v569 = vmul.f32 %v568, %v567
        %v570 = vmul.f32 0.5, %v569
        %v571 = vsub.f32 1.5, %v570
        %v572 = vmul.f32 %v567, %v571
        %vm573 = vweird.f32 %v566
        %vm574 = vweird.f32 %v567
        %vm575 = vmor %vm573, %vm574
        %v576 = vsel %vm575, %v567, %v572
        %v577 = vmul.f32 %v561, %v576
        %v578 = vld [vmem:[%s3] sm:$0x1]
        %v580 = vperm.slane %v578, 0
        %v582 = vmul.f32 %v577, %v580
        %v583 = vld [vmem:[%s4] sm:$0x1]
        %v585 = vperm.slane %v583, 0
        %v587 = vadd.f32 %v582, %v585
        %588 = vst [vmem:[%s194] sm:$0xff] %v587
        %s589 = sand.u32 %s118, 1
        %s590 = scalar_lea.sflag [#allocation8], %s589
        %s591 = sand.u32 %s118, 1
        %s592 = smul.addr %s591, 8
        %s593 = scalar_lea.vmem [#allocation9], %s592
        // Predicated region
        $region109: #{tpu_custom_call.1} parent=31 // pred_check
          %p594 = pneg %p128
        $region110: #{tpu_custom_call.1} parent=31 // pred_check_branch
          %596 = sbr.rel (%p594) target = $region112
        $region111: #{tpu_custom_call.1} parent=31 // pred_region
          %598 = vsyncadd %s590, 0
          %s599 = smul.addr %s32, 2
          %s600 = sadd.s32 %s33, %s599
          %s601 = smul.addr %s600, 8
          %s602 = scalar_lea.hbm %s5, %s601
          %s604 = sshll.u32 %s593, 4
          %s605 = int_to_ptr.vmem [resolvable:$true] %s604
          %s606 = sshll.u32 %s602, 4
          %s607 = int_to_ptr.hbm [resolvable:$true] %s606
          %609 = dma.vmem_to_hbm [thread:$0]  %s605, 128, %s607, %s590
        $region112: #{tpu_custom_call.1} parent=31 // pred_fallthru
          _
      $region32: #{tpu_custom_call.1} parent=5 // pred_fallthru
        _
      %p610 = scmp.le.s32.totalorder 2, %s23
      // Predicated region
      $region113: #{tpu_custom_call.1} parent=5 // pred_check
        %p611 = pneg %p610
      $region114: #{tpu_custom_call.1} parent=5 // pred_check_branch
        %613 = sbr.rel (%p611) target = $region116
      $region115: #{tpu_custom_call.1} parent=5 // pred_region
        %s614 = ssub.s32 %s23, 2
        // Predicated region
        $region117: #{tpu_custom_call.1} parent=115 // pred_check
          %p615 = pneg %p134
        $region118: #{tpu_custom_call.1} parent=115 // pred_check_branch
          %617 = sbr.rel (%p615) target = $region120
        $region119: #{tpu_custom_call.1} parent=115 // pred_region
          %s618 = sand.u32 %s119, 1
          %s619 = scalar_lea.sflag [#allocation8], %s618
          %s620 = sand.u32 %s119, 1
          %s621 = smul.addr %s620, 8
          %s622 = scalar_lea.vmem [#allocation9], %s621
          %624 = dma.done %s619, 128
        $region120: #{tpu_custom_call.1} parent=115 // pred_fallthru
          _
      $region116: #{tpu_custom_call.1} parent=5 // pred_fallthru
        _
    $region6: #{tpu_custom_call.1} parent=1 // loop_footer
      %s27 = sadd.s32 1, %s23
    $region7: #{tpu_custom_call.1} parent=1 // loop_footer_branch
      %22 = sbr.rel target = $region3
    $region8: #{tpu_custom_call.1} parent=1 // loop_exit
      _
    %625 = vsyncpa [#allocation7], 1
    %s626 = scalar_lea.sflag [#allocation7], 1
    %627 = vsyncpa %s626, 1
    %628 = vsyncpa [#allocation8], 1
    %s629 = scalar_lea.sflag [#allocation8], 1
    %630 = vsyncpa %s629, 1
  %631 = vsyncmov [#allocation3]
  %s632 = vpop.sfrf %631
  %p633 = scmp.eq.s32.totalorder %s632, 0
  %p634 = pneg %p633
  %636 = shalt.err (%p634)
  %s637 = scalar_lea.sflag [#allocation3], 1
  %638 = vsyncmov %s637
  %s639 = vpop.sfrf %638
  %p640 = scmp.eq.s32.totalorder %s639, 0
  %p641 = pneg %p640
  %643 = shalt.err (%p641)
  %s644 = scalar_lea.sflag [#allocation3], 2
  %645 = vsyncmov %s644
  %s646 = vpop.sfrf %645
  %p647 = scmp.eq.s32.totalorder %s646, 0
  %p648 = pneg %p647
  %650 = shalt.err (%p648)
  %s651 = scalar_lea.sflag [#allocation3], 3
  %652 = vsyncmov %s651
  %s653 = vpop.sfrf %652
  %p654 = scmp.eq.s32.totalorder %s653, 0
  %p655 = pneg %p654
  %657 = shalt.err (%p655)
  %s658 = scalar_lea.sflag [#allocation3], 4
  %659 = vsyncmov %s658
  %s660 = vpop.sfrf %659
  %p661 = scmp.eq.s32.totalorder %s660, 0
  %p662 = pneg %p661
  %664 = shalt.err (%p662)
  %s665 = scalar_lea.sflag [#allocation3], 5
  %666 = vsyncmov %s665
  %s667 = vpop.sfrf %666
  %p668 = scmp.eq.s32.totalorder %s667, 0
  %p669 = pneg %p668
  %671 = shalt.err (%p669)
  %s672 = scalar_lea.sflag [#allocation3], 6
  %673 = vsyncmov %s672
  %s674 = vpop.sfrf %673
  %p675 = scmp.eq.s32.totalorder %s674, 0
  %p676 = pneg %p675
  %678 = shalt.err (%p676)
  %s679 = scalar_lea.sflag [#allocation3], 7
  %680 = vsyncmov %s679
  %s681 = vpop.sfrf %680
  %p682 = scmp.eq.s32.totalorder %s681, 0
  %p683 = pneg %p682
  %685 = shalt.err (%p683)
  %s686 = scalar_lea.sflag [#allocation3], 8
  %687 = vsyncmov %s686
  %s688 = vpop.sfrf %687
  %p689 = scmp.eq.s32.totalorder %s688, 0
  %p690 = pneg %p689
  %692 = shalt.err (%p690)
  %s693 = scalar_lea.sflag [#allocation3], 9
  %694 = vsyncmov %s693
  %s695 = vpop.sfrf %694
  %p696 = scmp.eq.s32.totalorder %s695, 0
  %p697 = pneg %p696
  %699 = shalt.err (%p697)
  %s700 = scalar_lea.sflag [#allocation3], 10
  %701 = vsyncmov %s700
  %s702 = vpop.sfrf %701
  %p703 = scmp.eq.s32.totalorder %s702, 0
  %p704 = pneg %p703
  %706 = shalt.err (%p704)
  %s707 = scalar_lea.sflag [#allocation3], 11
  %708 = vsyncmov %s707
  %s709 = vpop.sfrf %708
  %p710 = scmp.eq.s32.totalorder %s709, 0
  %p711 = pneg %p710
  %713 = shalt.err (%p711)
  %s714 = scalar_lea.sflag [#allocation3], 12
  %715 = vsyncmov %s714
  %s716 = vpop.sfrf %715
  %p717 = scmp.eq.s32.totalorder %s716, 0
  %p718 = pneg %p717
  %720 = shalt.err (%p718)
  %s721 = scalar_lea.sflag [#allocation3], 13
  %722 = vsyncmov %s721
  %s723 = vpop.sfrf %722
  %p724 = scmp.eq.s32.totalorder %s723, 0
  %p725 = pneg %p724
  %727 = shalt.err (%p725)
  %s728 = scalar_lea.sflag [#allocation3], 14
  %729 = vsyncmov %s728
  %s730 = vpop.sfrf %729
  %p731 = scmp.eq.s32.totalorder %s730, 0
  %p732 = pneg %p731
  %734 = shalt.err (%p732)
  %s735 = scalar_lea.sflag [#allocation3], 15
  %736 = vsyncmov %s735
  %s737 = vpop.sfrf %736
  %p738 = scmp.eq.s32.totalorder %s737, 0
  %p739 = pneg %p738
  %741 = shalt.err (%p739)

</llo_original>
